<compile_context>
chip_gen: v7x
topology: tpu7x:2x2x1
jax: 0.10.0
libtpu: 0.0.40
codegen_flags: <defaults>
</compile_context>

<pallas_src>
import math

import jax
import jax.numpy as jnp
from jax.experimental import pallas as pl
from jax.experimental.pallas import tpu as pltpu

DIM = 32          # model dim (torch default 128; small for the demo)
NUM_HEADS = 4
HEAD_DIM = DIM // NUM_HEADS
SCALE = DIM ** (-0.5)   # matches torch: self.dim ** (-0.5), NOT head_dim


def _gelu(x):
    # exact (erf-based) GELU, matching torch.nn.GELU() default
    return 0.5 * x * (1.0 + jax.lax.erf(x * (1.0 / math.sqrt(2.0))))


def dsr_attention_kernel(x_ref, cm_ref, wq_ref, bq_ref, wkv_ref, bkv_ref, o_ref):
    # Batch dim is squeezed by the BlockSpecs: refs are 2-D (L, D) / (L2, D).
    x = x_ref[...]        # (L,  D)
    cm = cm_ref[...]      # (L2, D)

    # ---- projections ------------------------------------------------------
    # Q projection + fused KV projection (one MXU push of width 2*D).
    # NOTE: on v6e/v7x at real sizes (D=128, long L), cast operands to bf16
    #       here (keep preferred_element_type=f32) if tolerance allows.
    q = _gelu(jnp.dot(x, wq_ref[...], preferred_element_type=jnp.float32)
              + bq_ref[...])
    q = q * SCALE                                   # fold softmax scale once
    kv = _gelu(jnp.dot(cm, wkv_ref[...], preferred_element_type=jnp.float32)
               + bkv_ref[...])                      # (L2, 2D)
    k = kv[:, :DIM]
    v = kv[:, DIM:]

    # ---- heads ------------------------------------------------------------
    # Build head-major (H, L, dh) values once; run attention for all heads as
    # two batched contractions instead of 2*H tiny per-head matmuls.
    def to_heads(t):
        return jnp.stack(
            [t[:, h * HEAD_DIM:(h + 1) * HEAD_DIM] for h in range(NUM_HEADS)],
            axis=0)

    qh, kh, vh = to_heads(q), to_heads(k), to_heads(v)   # (H, L, dh) each

    # scores: contract last dims directly (no explicit k.T materialized)
    s = jnp.einsum('hqd,hkd->hqk', qh, kh,
                   preferred_element_type=jnp.float32)   # (H, L, L2)
    s = s - jnp.max(s, axis=-1, keepdims=True)
    p = jnp.exp(s)
    inv = pl.reciprocal(jnp.sum(p, axis=-1, keepdims=True), approx=True)
    attn = p * inv
    oh = jnp.einsum('hqk,hkd->hqd', attn, vh,
                    preferred_element_type=jnp.float32)  # (H, L, dh)

    # ---- merge heads + single lane-dense store ------------------------------
    out = jnp.concatenate([oh[h] for h in range(NUM_HEADS)], axis=-1)  # (L, D)
    o_ref[...] = out.astype(o_ref.dtype)


def dsr_attention(x, change_map, wq, bq, wkv, bkv):
    b, l, d = x.shape
    _, l2, _ = change_map.shape
    assert d == DIM

    bq2 = bq.reshape(1, d)
    bkv2 = bkv.reshape(1, 2 * d)

    # Advisory cost estimate (matmuls + erf/exp transcendentals + HBM traffic).
    flops = 2 * b * (l * d * d + l2 * d * 2 * d
                     + 2 * NUM_HEADS * l * l2 * HEAD_DIM)
    transcendentals = b * (l * d + 2 * l2 * d + NUM_HEADS * l * l2)
    bytes_accessed = 4 * (x.size + change_map.size + wq.size + bq.size
                          + wkv.size + bkv.size + b * l * d)

    return pl.pallas_call(
        dsr_attention_kernel,
        out_shape=jax.ShapeDtypeStruct((b, l, d), x.dtype),
        grid=(b,),
        in_specs=[
            pl.BlockSpec((pl.Squeezed(), l, d), lambda i: (i, 0, 0)),   # x
            pl.BlockSpec((pl.Squeezed(), l2, d), lambda i: (i, 0, 0)),  # cm
            pl.BlockSpec((d, d), lambda i: (0, 0)),                     # Wq
            pl.BlockSpec((1, d), lambda i: (0, 0)),                     # bq
            pl.BlockSpec((d, 2 * d), lambda i: (0, 0)),                 # Wkv
            pl.BlockSpec((1, 2 * d), lambda i: (0, 0)),                 # bkv
        ],
        out_specs=pl.BlockSpec((pl.Squeezed(), l, d), lambda i: (i, 0, 0)),
        compiler_params=pltpu.CompilerParams(
            dimension_semantics=("parallel",)),
        cost_estimate=pl.CostEstimate(
            flops=flops,
            transcendentals=transcendentals,
            bytes_accessed=bytes_accessed),
    )(x, change_map, wq, bq2, wkv, bkv2)


def dsr_attention_reference(x, change_map, wq, bq, wkv, bkv):
    """Pure-JAX reference mirroring the PyTorch forward."""
    b, l, d = x.shape
    q = _gelu(x @ wq + bq)
    kv = change_map @ wkv + bkv
    k, v = jnp.split(kv, 2, axis=-1)
    k, v = _gelu(k), _gelu(v)

    def split_heads(t):
        bb, n, _ = t.shape
        return t.reshape(bb, n, NUM_HEADS, HEAD_DIM).transpose(0, 2, 1, 3)

    qh, kh, vh = map(split_heads, (q, k, v))
    logits = jnp.einsum('bhqd,bhkd->bhqk', qh, kh) * (DIM ** -0.5)
    w = jax.nn.softmax(logits, axis=-1)
    out = jnp.einsum('bhqk,bhkd->bhqd', w, vh)
    return out.transpose(0, 2, 1, 3).reshape(b, l, d)


if __name__ == "__main__":
    key = jax.random.PRNGKey(0)
    k_x, k_cm, k_wq, k_bq, k_wkv, k_bkv = jax.random.split(key, 6)

    B, L, L2, D = 2, 16, 16, DIM   # L = 16 -> h = w = 4 (l ** 0.5 integer)

    x = jax.random.normal(k_x, (B, L, D), dtype=jnp.float32)
    change_map = jax.random.normal(k_cm, (B, L2, D), dtype=jnp.float32)

    # Deterministic synthetic parameters (nn.Linear shapes, stored transposed).
    wq = jax.random.normal(k_wq, (D, D), dtype=jnp.float32) * 0.1
    bq = jax.random.normal(k_bq, (D,), dtype=jnp.float32) * 0.1
    wkv = jax.random.normal(k_wkv, (D, 2 * D), dtype=jnp.float32) * 0.1
    bkv = jax.random.normal(k_bkv, (2 * D,), dtype=jnp.float32) * 0.1

    out = dsr_attention(x, change_map, wq, bq, wkv, bkv)
    out = jax.block_until_ready(out)

    ref = dsr_attention_reference(x, change_map, wq, bq, wkv, bkv)
    assert out.shape == (B, L, D)
    # tolerance loosened slightly vs 1e-4: softmax denom uses the EUP
    # approximate reciprocal (pl.reciprocal(approx=True)).
    assert jnp.allclose(out, ref, atol=2e-3, rtol=2e-3), (
        f"max abs err {jnp.max(jnp.abs(out - ref))}")

    print("KERNEL_OK")
</pallas_src>

<mosaic_0001>
module attributes {stable_mosaic.version = 11 : i64} {
  func.func @dsr_attention_kernel(%arg0: i32, %arg1: memref<1x16x32xf32, #tpu.memory_space<vmem>>, %arg2: memref<1x16x32xf32, #tpu.memory_space<vmem>>, %arg3: memref<32x32xf32, #tpu.memory_space<vmem>>, %arg4: memref<1x32xf32, #tpu.memory_space<vmem>>, %arg5: memref<32x64xf32, #tpu.memory_space<vmem>>, %arg6: memref<1x64xf32, #tpu.memory_space<vmem>>, %arg7: memref<1x16x32xf32, #tpu.memory_space<vmem>>) attributes {dimension_semantics = [#tpu.dimension_semantics<parallel>], iteration_bounds = array<i64: 2>, scalar_prefetch = 0 : i64, scratch_operands = 0 : i64, tpu.core_type = #tpu.core_type<tc>, window_params = [{transform_indices = @transform_0, window_bounds = array<i64: 1, 16, 32>}, {transform_indices = @transform_1, window_bounds = array<i64: 1, 16, 32>}, {pipeline_mode = #tpu.pipeline_mode<synchronous>, transform_indices = @transform_2, window_bounds = array<i64: 32, 32>}, {pipeline_mode = #tpu.pipeline_mode<synchronous>, transform_indices = @transform_3, window_bounds = array<i64: 1, 32>}, {pipeline_mode = #tpu.pipeline_mode<synchronous>, transform_indices = @transform_4, window_bounds = array<i64: 32, 64>}, {pipeline_mode = #tpu.pipeline_mode<synchronous>, transform_indices = @transform_5, window_bounds = array<i64: 1, 64>}, {transform_indices = @transform_6, window_bounds = array<i64: 1, 16, 32>}]} {
    %c0 = arith.constant 0 : index
    %c0_0 = arith.constant 0 : index
    %c0_1 = arith.constant 0 : index
    %0 = vector.load %arg1[%c0, %c0_0, %c0_1] : memref<1x16x32xf32, #tpu.memory_space<vmem>>, vector<1x16x32xf32>
    %1 = vector.shape_cast %0 : vector<1x16x32xf32> to vector<16x32xf32>
    %c0_2 = arith.constant 0 : index
    %c0_3 = arith.constant 0 : index
    %c0_4 = arith.constant 0 : index
    %2 = vector.load %arg2[%c0_2, %c0_3, %c0_4] : memref<1x16x32xf32, #tpu.memory_space<vmem>>, vector<1x16x32xf32>
    %3 = vector.shape_cast %2 : vector<1x16x32xf32> to vector<16x32xf32>
    %c0_5 = arith.constant 0 : index
    %c0_6 = arith.constant 0 : index
    %4 = vector.load %arg3[%c0_5, %c0_6] : memref<32x32xf32, #tpu.memory_space<vmem>>, vector<32x32xf32>
    %cst = arith.constant dense<0.000000e+00> : vector<16x32xf32>
    %5 = tpu.matmul %1, %4, %cst {dimension_numbers = #tpu.dot_dimension_numbers<[1], [0], [0], [1], [0, 0, 1, 1], [], []>} : vector<16x32xf32>, vector<32x32xf32>, vector<16x32xf32> -> vector<16x32xf32>
    %c0_7 = arith.constant 0 : index
    %c0_8 = arith.constant 0 : index
    %6 = vector.load %arg4[%c0_7, %c0_8] : memref<1x32xf32, #tpu.memory_space<vmem>>, vector<1x32xf32>
    %7 = vector.broadcast %6 : vector<1x32xf32> to vector<16x32xf32>
    %8 = arith.addf %5, %7 : vector<16x32xf32>
    %cst_9 = arith.constant 5.000000e-01 : f32
    %9 = vector.broadcast %cst_9 : f32 to vector<16x32xf32>
    %10 = arith.mulf %9, %8 : vector<16x32xf32>
    %cst_10 = arith.constant 0.707106769 : f32
    %11 = vector.broadcast %cst_10 : f32 to vector<16x32xf32>
    %12 = arith.mulf %8, %11 : vector<16x32xf32>
    %13 = math.erf %12 : vector<16x32xf32>
    %cst_11 = arith.constant 1.000000e+00 : f32
    %14 = vector.broadcast %cst_11 : f32 to vector<16x32xf32>
    %15 = arith.addf %14, %13 : vector<16x32xf32>
    %16 = arith.mulf %10, %15 : vector<16x32xf32>
    %cst_12 = arith.constant 0.176776692 : f32
    %17 = vector.broadcast %cst_12 : f32 to vector<16x32xf32>
    %18 = arith.mulf %16, %17 : vector<16x32xf32>
    %c0_13 = arith.constant 0 : index
    %c0_14 = arith.constant 0 : index
    %19 = vector.load %arg5[%c0_13, %c0_14] : memref<32x64xf32, #tpu.memory_space<vmem>>, vector<32x64xf32>
    %cst_15 = arith.constant dense<0.000000e+00> : vector<16x64xf32>
    %20 = tpu.matmul %3, %19, %cst_15 {dimension_numbers = #tpu.dot_dimension_numbers<[1], [0], [0], [1], [0, 0, 1, 1], [], []>} : vector<16x32xf32>, vector<32x64xf32>, vector<16x64xf32> -> vector<16x64xf32>
    %c0_16 = arith.constant 0 : index
    %c0_17 = arith.constant 0 : index
    %21 = vector.load %arg6[%c0_16, %c0_17] : memref<1x64xf32, #tpu.memory_space<vmem>>, vector<1x64xf32>
    %22 = vector.broadcast %21 : vector<1x64xf32> to vector<16x64xf32>
    %23 = arith.addf %20, %22 : vector<16x64xf32>
    %cst_18 = arith.constant 5.000000e-01 : f32
    %24 = vector.broadcast %cst_18 : f32 to vector<16x64xf32>
    %25 = arith.mulf %24, %23 : vector<16x64xf32>
    %cst_19 = arith.constant 0.707106769 : f32
    %26 = vector.broadcast %cst_19 : f32 to vector<16x64xf32>
    %27 = arith.mulf %23, %26 : vector<16x64xf32>
    %28 = math.erf %27 : vector<16x64xf32>
    %cst_20 = arith.constant 1.000000e+00 : f32
    %29 = vector.broadcast %cst_20 : f32 to vector<16x64xf32>
    %30 = arith.addf %29, %28 : vector<16x64xf32>
    %31 = arith.mulf %25, %30 : vector<16x64xf32>
    %32 = vector.extract_strided_slice %31 {offsets = [0, 0], sizes = [16, 32], strides = [1, 1]} : vector<16x64xf32> to vector<16x32xf32>
    %33 = vector.extract_strided_slice %31 {offsets = [0, 32], sizes = [16, 32], strides = [1, 1]} : vector<16x64xf32> to vector<16x32xf32>
    %34 = vector.extract_strided_slice %18 {offsets = [0, 0], sizes = [16, 8], strides = [1, 1]} : vector<16x32xf32> to vector<16x8xf32>
    %35 = vector.extract_strided_slice %18 {offsets = [0, 8], sizes = [16, 8], strides = [1, 1]} : vector<16x32xf32> to vector<16x8xf32>
    %36 = vector.extract_strided_slice %18 {offsets = [0, 16], sizes = [16, 8], strides = [1, 1]} : vector<16x32xf32> to vector<16x8xf32>
    %37 = vector.extract_strided_slice %18 {offsets = [0, 24], sizes = [16, 8], strides = [1, 1]} : vector<16x32xf32> to vector<16x8xf32>
    %38 = vector.shape_cast %34 : vector<16x8xf32> to vector<1x16x8xf32>
    %39 = vector.shape_cast %35 : vector<16x8xf32> to vector<1x16x8xf32>
    %40 = vector.shape_cast %36 : vector<16x8xf32> to vector<1x16x8xf32>
    %41 = vector.shape_cast %37 : vector<16x8xf32> to vector<1x16x8xf32>
    %42 = tpu.concatenate %38, %39, %40, %41 in 0 : vector<1x16x8xf32>, vector<1x16x8xf32>, vector<1x16x8xf32>, vector<1x16x8xf32> -> vector<4x16x8xf32>
    %43 = vector.extract_strided_slice %32 {offsets = [0, 0], sizes = [16, 8], strides = [1, 1]} : vector<16x32xf32> to vector<16x8xf32>
    %44 = vector.extract_strided_slice %32 {offsets = [0, 8], sizes = [16, 8], strides = [1, 1]} : vector<16x32xf32> to vector<16x8xf32>
    %45 = vector.extract_strided_slice %32 {offsets = [0, 16], sizes = [16, 8], strides = [1, 1]} : vector<16x32xf32> to vector<16x8xf32>
    %46 = vector.extract_strided_slice %32 {offsets = [0, 24], sizes = [16, 8], strides = [1, 1]} : vector<16x32xf32> to vector<16x8xf32>
    %47 = vector.shape_cast %43 : vector<16x8xf32> to vector<1x16x8xf32>
    %48 = vector.shape_cast %44 : vector<16x8xf32> to vector<1x16x8xf32>
    %49 = vector.shape_cast %45 : vector<16x8xf32> to vector<1x16x8xf32>
    %50 = vector.shape_cast %46 : vector<16x8xf32> to vector<1x16x8xf32>
    %51 = tpu.concatenate %47, %48, %49, %50 in 0 : vector<1x16x8xf32>, vector<1x16x8xf32>, vector<1x16x8xf32>, vector<1x16x8xf32> -> vector<4x16x8xf32>
    %52 = vector.extract_strided_slice %33 {offsets = [0, 0], sizes = [16, 8], strides = [1, 1]} : vector<16x32xf32> to vector<16x8xf32>
    %53 = vector.extract_strided_slice %33 {offsets = [0, 8], sizes = [16, 8], strides = [1, 1]} : vector<16x32xf32> to vector<16x8xf32>
    %54 = vector.extract_strided_slice %33 {offsets = [0, 16], sizes = [16, 8], strides = [1, 1]} : vector<16x32xf32> to vector<16x8xf32>
    %55 = vector.extract_strided_slice %33 {offsets = [0, 24], sizes = [16, 8], strides = [1, 1]} : vector<16x32xf32> to vector<16x8xf32>
    %56 = vector.shape_cast %52 : vector<16x8xf32> to vector<1x16x8xf32>
    %57 = vector.shape_cast %53 : vector<16x8xf32> to vector<1x16x8xf32>
    %58 = vector.shape_cast %54 : vector<16x8xf32> to vector<1x16x8xf32>
    %59 = vector.shape_cast %55 : vector<16x8xf32> to vector<1x16x8xf32>
    %60 = tpu.concatenate %56, %57, %58, %59 in 0 : vector<1x16x8xf32>, vector<1x16x8xf32>, vector<1x16x8xf32>, vector<1x16x8xf32> -> vector<4x16x8xf32>
    "tpu.trace_start"() <{level = 10 : i32, message = "hqd,hkd->hqk"}> : () -> ()
    %cst_21 = arith.constant dense<0.000000e+00> : vector<4x16x16xf32>
    %61 = tpu.matmul %42, %51, %cst_21 {dimension_numbers = #tpu.dot_dimension_numbers<[2], [2], [1], [1], [0, 0, 0, 1, 1, 1], [0], [0]>} : vector<4x16x8xf32>, vector<4x16x8xf32>, vector<4x16x16xf32> -> vector<4x16x16xf32>
    "tpu.trace_stop"() : () -> ()
    %cst_22 = arith.constant dense<0xFF800000> : vector<4x16xf32>
    %62 = vector.multi_reduction <maximumf>, %61, %cst_22 [2] : vector<4x16x16xf32> to vector<4x16xf32>
    %63 = vector.shape_cast %62 : vector<4x16xf32> to vector<4x16x1xf32>
    %64 = vector.broadcast %63 : vector<4x16x1xf32> to vector<4x16x16xf32>
    %65 = arith.subf %61, %64 : vector<4x16x16xf32>
    %66 = math.exp %65 : vector<4x16x16xf32>
    %cst_23 = arith.constant dense<0.000000e+00> : vector<4x16xf32>
    %67 = vector.multi_reduction <add>, %66, %cst_23 [2] : vector<4x16x16xf32> to vector<4x16xf32>
    %68 = vector.shape_cast %67 : vector<4x16xf32> to vector<4x16x1xf32>
    %69 = tpu.reciprocal %68 {approx = true} : vector<4x16x1xf32> -> vector<4x16x1xf32>
    %70 = vector.broadcast %69 : vector<4x16x1xf32> to vector<4x16x16xf32>
    %71 = arith.mulf %66, %70 : vector<4x16x16xf32>
    "tpu.trace_start"() <{level = 10 : i32, message = "hqk,hkd->hqd"}> : () -> ()
    %cst_24 = arith.constant dense<0.000000e+00> : vector<4x16x8xf32>
    %72 = tpu.matmul %71, %60, %cst_24 {dimension_numbers = #tpu.dot_dimension_numbers<[2], [1], [1], [2], [0, 0, 0, 1, 1, 2], [0], [0]>} : vector<4x16x16xf32>, vector<4x16x8xf32>, vector<4x16x8xf32> -> vector<4x16x8xf32>
    "tpu.trace_stop"() : () -> ()
    %73 = vector.extract_strided_slice %72 {offsets = [0, 0, 0], sizes = [1, 16, 8], strides = [1, 1, 1]} : vector<4x16x8xf32> to vector<1x16x8xf32>
    %74 = vector.shape_cast %73 : vector<1x16x8xf32> to vector<16x8xf32>
    %75 = vector.extract_strided_slice %72 {offsets = [1, 0, 0], sizes = [1, 16, 8], strides = [1, 1, 1]} : vector<4x16x8xf32> to vector<1x16x8xf32>
    %76 = vector.shape_cast %75 : vector<1x16x8xf32> to vector<16x8xf32>
    %77 = vector.extract_strided_slice %72 {offsets = [2, 0, 0], sizes = [1, 16, 8], strides = [1, 1, 1]} : vector<4x16x8xf32> to vector<1x16x8xf32>
    %78 = vector.shape_cast %77 : vector<1x16x8xf32> to vector<16x8xf32>
    %79 = vector.extract_strided_slice %72 {offsets = [3, 0, 0], sizes = [1, 16, 8], strides = [1, 1, 1]} : vector<4x16x8xf32> to vector<1x16x8xf32>
    %80 = vector.shape_cast %79 : vector<1x16x8xf32> to vector<16x8xf32>
    %81 = tpu.concatenate %74, %76, %78, %80 in 1 : vector<16x8xf32>, vector<16x8xf32>, vector<16x8xf32>, vector<16x8xf32> -> vector<16x32xf32>
    %c0_25 = arith.constant 0 : index
    %c0_26 = arith.constant 0 : index
    %c0_27 = arith.constant 0 : index
    %82 = vector.load %arg7[%c0_25, %c0_26, %c0_27] : memref<1x16x32xf32, #tpu.memory_space<vmem>>, vector<1x16x32xf32>
    %83 = vector.shape_cast %82 : vector<1x16x32xf32> to vector<16x32xf32>
    %84 = vector.shape_cast %81 : vector<16x32xf32> to vector<1x16x32xf32>
    tpu.vector_store %arg7[%c0_25, %c0_26, %c0_27], %84 {strides = array<i32>} : memref<1x16x32xf32, #tpu.memory_space<vmem>>, vector<1x16x32xf32>,
    return
  }
  func.func @transform_0(%arg0: i32) -> (i32, i32, i32) {
    %c0_i32 = arith.constant 0 : i32
    %c0_i32_0 = arith.constant 0 : i32
    %c0_i32_1 = arith.constant 0 : i32
    return %arg0, %c0_i32, %c0_i32_0 : i32, i32, i32
  }
  func.func @transform_1(%arg0: i32) -> (i32, i32, i32) {
    %c0_i32 = arith.constant 0 : i32
    %c0_i32_0 = arith.constant 0 : i32
    %c0_i32_1 = arith.constant 0 : i32
    return %arg0, %c0_i32, %c0_i32_0 : i32, i32, i32
  }
  func.func @transform_2(%arg0: i32) -> (i32, i32) {
    %c0_i32 = arith.constant 0 : i32
    %c0_i32_0 = arith.constant 0 : i32
    %c0_i32_1 = arith.constant 0 : i32
    return %c0_i32, %c0_i32_0 : i32, i32
  }
  func.func @transform_3(%arg0: i32) -> (i32, i32) {
    %c0_i32 = arith.constant 0 : i32
    %c0_i32_0 = arith.constant 0 : i32
    %c0_i32_1 = arith.constant 0 : i32
    return %c0_i32, %c0_i32_0 : i32, i32
  }
  func.func @transform_4(%arg0: i32) -> (i32, i32) {
    %c0_i32 = arith.constant 0 : i32
    %c0_i32_0 = arith.constant 0 : i32
    %c0_i32_1 = arith.constant 0 : i32
    return %c0_i32, %c0_i32_0 : i32, i32
  }
  func.func @transform_5(%arg0: i32) -> (i32, i32) {
    %c0_i32 = arith.constant 0 : i32
    %c0_i32_0 = arith.constant 0 : i32
    %c0_i32_1 = arith.constant 0 : i32
    return %c0_i32, %c0_i32_0 : i32, i32
  }
  func.func @transform_6(%arg0: i32) -> (i32, i32, i32) {
    %c0_i32 = arith.constant 0 : i32
    %c0_i32_0 = arith.constant 0 : i32
    %c0_i32_1 = arith.constant 0 : i32
    return %arg0, %c0_i32, %c0_i32_0 : i32, i32, i32
  }
}

</mosaic_0001>

<llo_original>
// kernel: tpu_custom_call.1
$region0: #{tpu_custom_call.1}
  #allocation0 [shape = 'u32[]', space=smem, size = 0x4, offset = 0x4, fixed_abs, tag = 'smem constant byte address 0x4 - core index']
  #allocation1 [shape = 'u32[144,128]{1,0:T(1,128)}', space=vmem, size = 0x12000, scoped, tag = 'internal scratch']
  %s0 = inlined_call_operand.hbm [shape: f32[2,16,32], index: 0, kind: input, shape index: {}]
  %s1 = inlined_call_operand.hbm [shape: f32[2,16,32], index: 1, kind: input, shape index: {}]
  %s2 = inlined_call_operand.hbm [shape: f32[32,32], index: 2, kind: input, shape index: {}]
  %s3 = inlined_call_operand.vmem [shape: f32[1,32], index: 3, kind: input, shape index: {}]
  %s4 = inlined_call_operand.hbm [shape: f32[32,64], index: 4, kind: input, shape index: {}]
  %s5 = inlined_call_operand.vmem [shape: f32[1,64], index: 5, kind: input, shape index: {}]
  %s6 = inlined_call_operand.hbm [shape: f32[2,16,32], index: 6, kind: output, shape index: {}]
  %s7 = sld [smem:[#allocation0]]
  $region73: #{tpu_custom_call.1} parent=0
    _
  %s9 = ssub.s32 1, %s7
  %s10 = scalar_select 0, %s9, %s7
  $region1: #{tpu_custom_call.1} parent=0
    #allocation2 [shape = 'u8[16384]{0}', space=vmem, size = 0x4000, scoped, tag = 'input window, operand 0']
    #allocation3 [shape = 's32[2]{0}', space=sflag, size = 0x8, scoped, tag = 'scoped memory for tpu_custom_call.1']
    #allocation4 [shape = 's32[2]{0}', space=sflag, size = 0x8, scoped, tag = 'scoped memory for tpu_custom_call.1']
    #allocation5 [shape = 'u8[16384]{0}', space=vmem, size = 0x4000, scoped, tag = 'input window, operand 1']
    #allocation6 [shape = 's32[2]{0}', space=sflag, size = 0x8, scoped, tag = 'scoped memory for tpu_custom_call.1']
    #allocation7 [shape = 'u8[16384]{0}', space=vmem, size = 0x4000, scoped, tag = 'input window, operand 2, single buffered']
    #allocation8 [shape = 'u8[16384]{0}', space=vmem, size = 0x4000, scoped, tag = 'input window, operand 4, single buffered']
    #allocation9 [shape = 's32[1]{0}', space=sflag, size = 0x4, scoped, tag = 'scoped memory for tpu_custom_call.1']
    #allocation10 [shape = 'u8[16384]{0}', space=vmem, size = 0x4000, scoped, tag = 'output window, operand 0']
    %11 = vsyncpa [#allocation3], 0
    %s12 = scalar_lea.sflag [#allocation3], 1
    %13 = vsyncpa %s12, 0
    %14 = vsyncpa [#allocation6], 0
    %s15 = scalar_lea.sflag [#allocation6], 1
    %16 = vsyncpa %s15, 0
    %17 = vsyncpa [#allocation9], 0
    %18 = vsyncpa [#allocation4], 0
    %s19 = scalar_lea.sflag [#allocation4], 1
    %20 = vsyncpa %s19, 0
    loop: start=0, step=1, limit=4
    $region2: #{tpu_custom_call.1} parent=1 // loop_pre_header
      _
    $region3: #{tpu_custom_call.1} parent=1 // loop_header
      %s22 = sphi 0, %s26
      %p23 = scmp.ge.s32.totalorder %s22, 4
      %s32 = sphi 0, %s34
      %s35 = sphi 0, %s32
      %s36 = sphi 0, %s35
      %s52 = sphi 0, %s36
      %s58 = sphi 0, %s60
      %s61 = sphi 0, %s58
      %s62 = sphi 0, %s61
      %s78 = sphi 0, %s62
      %s82 = sphi 0, %s82
      %s84 = sphi 0, %s82
      %s85 = sphi 0, %s84
      %s99 = sphi 0, %s85
      %s103 = sphi 0, %s103
      %s105 = sphi 0, %s103
      %s106 = sphi 0, %s105
      %s120 = sphi 0, %s106
      %s124 = sphi 0, %s124
      %s126 = sphi 0, %s124
      %s127 = sphi 0, %s126
      %s141 = sphi 0, %s127
      %s145 = sphi 0, %s145
      %s147 = sphi 0, %s145
      %s148 = sphi 0, %s147
      %s162 = sphi 0, %s148
      %s168 = sphi 0, %s170
      %s171 = sphi 0, %s168
      %s172 = sphi 0, %s171
      %s188 = sphi 0, %s172
    $region4: #{tpu_custom_call.1} parent=1 // loop_header_branch
      %25 = sbr.rel (%p23) target = $region8
    $region5: #{tpu_custom_call.1} parent=1 // loop_body
      %s27 = ssub.s32 %s22, 1
      %s28 = ssub.s32 %s22, 2
      %s29 = sadd.s32 %s22, 1
      %s30 = ssub.s32 %s22, %s29
      %p31 = scmp.eq.s32.totalorder %s30, 0
      %s33 = sadd.s32 %s32, 1
      %s34 = scalar_select %p31, %s32, %s33
      %p37 = pneg %p31
      %p38 = scmp.eq.s32.totalorder %s22, 1
      %p39 = por %p37, %p38
      %p40 = scmp.ne.s32.totalorder %s32, %s35
      %p41 = scmp.eq.s32.totalorder %s22, 0
      %p42 = por %p40, %p41
      %p43 = scmp.ne.s32.totalorder %s32, %s35
      %p44 = scmp.eq.s32.totalorder %s27, 1
      %p45 = por %p43, %p44
      %p46 = scmp.ne.s32.totalorder %s35, %s36
      %p47 = scmp.eq.s32.totalorder %s27, 0
      %p48 = por %p46, %p47
      %p49 = scmp.ne.s32.totalorder %s35, %s36
      %p50 = scmp.eq.s32.totalorder %s28, 1
      %p51 = por %p49, %p50
      %p53 = scmp.ne.s32.totalorder %s36, %s52
      %p54 = scmp.eq.s32.totalorder %s28, 0
      %p55 = por %p53, %p54
      %s56 = ssub.s32 %s22, %s29
      %p57 = scmp.eq.s32.totalorder %s56, 0
      %s59 = sadd.s32 %s58, 1
      %s60 = scalar_select %p57, %s58, %s59
      %p63 = pneg %p57
      %p64 = scmp.eq.s32.totalorder %s22, 1
      %p65 = por %p63, %p64
      %p66 = scmp.ne.s32.totalorder %s58, %s61
      %p67 = scmp.eq.s32.totalorder %s22, 0
      %p68 = por %p66, %p67
      %p69 = scmp.ne.s32.totalorder %s58, %s61
      %p70 = scmp.eq.s32.totalorder %s27, 1
      %p71 = por %p69, %p70
      %p72 = scmp.ne.s32.totalorder %s61, %s62
      %p73 = scmp.eq.s32.totalorder %s27, 0
      %p74 = por %p72, %p73
      %p75 = scmp.ne.s32.totalorder %s61, %s62
      %p76 = scmp.eq.s32.totalorder %s28, 1
      %p77 = por %p75, %p76
      %p79 = scmp.ne.s32.totalorder %s62, %s78
      %p80 = scmp.eq.s32.totalorder %s28, 0
      %p81 = por %p79, %p80
      %s83 = sadd.s32 %s82, 1
      %p86 = scmp.eq.s32.totalorder %s22, 1
      %p87 = scmp.ne.s32.totalorder %s82, %s84
      %p88 = scmp.eq.s32.totalorder %s22, 0
      %p89 = por %p87, %p88
      %p90 = scmp.ne.s32.totalorder %s82, %s84
      %p91 = scmp.eq.s32.totalorder %s27, 1
      %p92 = por %p90, %p91
      %p93 = scmp.ne.s32.totalorder %s84, %s85
      %p94 = scmp.eq.s32.totalorder %s27, 0
      %p95 = por %p93, %p94
      %p96 = scmp.ne.s32.totalorder %s84, %s85
      %p97 = scmp.eq.s32.totalorder %s28, 1
      %p98 = por %p96, %p97
      %p100 = scmp.ne.s32.totalorder %s85, %s99
      %p101 = scmp.eq.s32.totalorder %s28, 0
      %p102 = por %p100, %p101
      %s104 = sadd.s32 %s103, 1
      %p107 = scmp.eq.s32.totalorder %s22, 1
      %p108 = scmp.ne.s32.totalorder %s103, %s105
      %p109 = scmp.eq.s32.totalorder %s22, 0
      %p110 = por %p108, %p109
      %p111 = scmp.ne.s32.totalorder %s103, %s105
      %p112 = scmp.eq.s32.totalorder %s27, 1
      %p113 = por %p111, %p112
      %p114 = scmp.ne.s32.totalorder %s105, %s106
      %p115 = scmp.eq.s32.totalorder %s27, 0
      %p116 = por %p114, %p115
      %p117 = scmp.ne.s32.totalorder %s105, %s106
      %p118 = scmp.eq.s32.totalorder %s28, 1
      %p119 = por %p117, %p118
      %p121 = scmp.ne.s32.totalorder %s106, %s120
      %p122 = scmp.eq.s32.totalorder %s28, 0
      %p123 = por %p121, %p122
      %s125 = sadd.s32 %s124, 1
      %p128 = scmp.eq.s32.totalorder %s22, 1
      %p129 = scmp.ne.s32.totalorder %s124, %s126
      %p130 = scmp.eq.s32.totalorder %s22, 0
      %p131 = por %p129, %p130
      %p132 = scmp.ne.s32.totalorder %s124, %s126
      %p133 = scmp.eq.s32.totalorder %s27, 1
      %p134 = por %p132, %p133
      %p135 = scmp.ne.s32.totalorder %s126, %s127
      %p136 = scmp.eq.s32.totalorder %s27, 0
      %p137 = por %p135, %p136
      %p138 = scmp.ne.s32.totalorder %s126, %s127
      %p139 = scmp.eq.s32.totalorder %s28, 1
      %p140 = por %p138, %p139
      %p142 = scmp.ne.s32.totalorder %s127, %s141
      %p143 = scmp.eq.s32.totalorder %s28, 0
      %p144 = por %p142, %p143
      %s146 = sadd.s32 %s145, 1
      %p149 = scmp.eq.s32.totalorder %s22, 1
      %p150 = scmp.ne.s32.totalorder %s145, %s147
      %p151 = scmp.eq.s32.totalorder %s22, 0
      %p152 = por %p150, %p151
      %p153 = scmp.ne.s32.totalorder %s145, %s147
      %p154 = scmp.eq.s32.totalorder %s27, 1
      %p155 = por %p153, %p154
      %p156 = scmp.ne.s32.totalorder %s147, %s148
      %p157 = scmp.eq.s32.totalorder %s27, 0
      %p158 = por %p156, %p157
      %p159 = scmp.ne.s32.totalorder %s147, %s148
      %p160 = scmp.eq.s32.totalorder %s28, 1
      %p161 = por %p159, %p160
      %p163 = scmp.ne.s32.totalorder %s148, %s162
      %p164 = scmp.eq.s32.totalorder %s28, 0
      %p165 = por %p163, %p164
      %s166 = ssub.s32 %s22, %s29
      %p167 = scmp.eq.s32.totalorder %s166, 0
      %s169 = sadd.s32 %s168, 1
      %s170 = scalar_select %p167, %s168, %s169
      %p173 = pneg %p167
      %p174 = scmp.eq.s32.totalorder %s22, 1
      %p175 = por %p173, %p174
      %p176 = scmp.ne.s32.totalorder %s168, %s171
      %p177 = scmp.eq.s32.totalorder %s22, 0
      %p178 = por %p176, %p177
      %p179 = scmp.ne.s32.totalorder %s168, %s171
      %p180 = scmp.eq.s32.totalorder %s27, 1
      %p181 = por %p179, %p180
      %p182 = scmp.ne.s32.totalorder %s171, %s172
      %p183 = scmp.eq.s32.totalorder %s27, 0
      %p184 = por %p182, %p183
      %p185 = scmp.ne.s32.totalorder %s171, %s172
      %p186 = scmp.eq.s32.totalorder %s28, 1
      %p187 = por %p185, %p186
      %p189 = scmp.ne.s32.totalorder %s172, %s188
      %p190 = scmp.eq.s32.totalorder %s28, 0
      %p191 = por %p189, %p190
      %p192 = scmp.le.s32.totalorder 1, %s22
      %p193 = scmp.lt.s32.totalorder %s22, 3
      %p194 = pnand %p192, %p193
      %p195 = pneg %p194
      // Predicated region
      $region9: #{tpu_custom_call.1} parent=5 // pred_check
        _
      $region10: #{tpu_custom_call.1} parent=5 // pred_check_branch
        %197 = sbr.rel (%p194) target = $region12
      $region11: #{tpu_custom_call.1} parent=5 // pred_region
        %s198 = ssub.s32 %s22, 1
        // Predicated region
        $region13: #{tpu_custom_call.1} parent=11 // pred_check
          %p199 = pneg %p95
        $region14: #{tpu_custom_call.1} parent=11 // pred_check_branch
          %201 = sbr.rel (%p199) target = $region16
        $region15: #{tpu_custom_call.1} parent=11 // pred_region
          %s203 = ssub.s32 512, 512
          %204 = vsyncadd [#allocation6], %s203
          %s205 = sshll.u32 [#allocation7], 4
          %s206 = int_to_ptr.vmem [resolvable:$true] %s205
          %211 = dma.hbm_to_vmem [thread:$0]  %s2, 512, %s206, [#allocation6], 128, 128, 8
        $region16: #{tpu_custom_call.1} parent=11 // pred_fallthru
          _
        // Predicated region
        $region17: #{tpu_custom_call.1} parent=11 // pred_check
          %p212 = pneg %p116
        $region18: #{tpu_custom_call.1} parent=11 // pred_check_branch
          %214 = sbr.rel (%p212) target = $region20
        $region19: #{tpu_custom_call.1} parent=11 // pred_region
          _
        $region20: #{tpu_custom_call.1} parent=11 // pred_fallthru
          _
        // Predicated region
        $region21: #{tpu_custom_call.1} parent=11 // pred_check
          %p215 = pneg %p137
        $region22: #{tpu_custom_call.1} parent=11 // pred_check_branch
          %217 = sbr.rel (%p215) target = $region24
        $region23: #{tpu_custom_call.1} parent=11 // pred_region
          %s219 = ssub.s32 512, 512
          %220 = vsyncadd [#allocation9], %s219
          %s221 = sshll.u32 [#allocation8], 4
          %s222 = int_to_ptr.vmem [resolvable:$true] %s221
          %227 = dma.hbm_to_vmem [thread:$0]  %s4, 512, %s222, [#allocation9], 128, 128, 8
        $region24: #{tpu_custom_call.1} parent=11 // pred_fallthru
          _
        // Predicated region
        $region25: #{tpu_custom_call.1} parent=11 // pred_check
          %p228 = pneg %p158
        $region26: #{tpu_custom_call.1} parent=11 // pred_check_branch
          %230 = sbr.rel (%p228) target = $region28
        $region27: #{tpu_custom_call.1} parent=11 // pred_region
          _
        $region28: #{tpu_custom_call.1} parent=11 // pred_fallthru
          _
      $region12: #{tpu_custom_call.1} parent=5 // pred_fallthru
        _
      %p231 = scmp.lt.s32.totalorder %s22, 2
      // Predicated region
      $region29: #{tpu_custom_call.1} parent=5 // pred_check
        %p232 = pneg %p231
      $region30: #{tpu_custom_call.1} parent=5 // pred_check_branch
        %234 = sbr.rel (%p232) target = $region32
      $region31: #{tpu_custom_call.1} parent=5 // pred_region
        // Predicated region
        $region33: #{tpu_custom_call.1} parent=31 // pred_check
          %p235 = pneg %p42
        $region34: #{tpu_custom_call.1} parent=31 // pred_check_branch
          %237 = sbr.rel (%p235) target = $region36
        $region35: #{tpu_custom_call.1} parent=31 // pred_region
          %s238 = sand.u32 %s32, 1
          %s239 = scalar_lea.sflag [#allocation3], %s238
          %s240 = sand.u32 %s32, 1
          %s241 = smul.addr %s240, 16
          %s242 = scalar_lea.vmem [#allocation2], %s241
          %s244 = ssub.s32 256, 256
          %245 = vsyncadd %s239, %s244
          %s246 = smul.addr %s22, 2
          %s247 = smul.addr %s246, 128
          %s248 = scalar_lea.hbm %s0, %s247
          %s249 = sshll.u32 %s242, 4
          %s250 = int_to_ptr.vmem [resolvable:$true] %s249
          %255 = dma.hbm_to_vmem [thread:$0]  %s248, 256, %s250, %s239, 128, 128, 8
        $region36: #{tpu_custom_call.1} parent=31 // pred_fallthru
          _
        // Predicated region
        $region37: #{tpu_custom_call.1} parent=31 // pred_check
          %p256 = pneg %p68
        $region38: #{tpu_custom_call.1} parent=31 // pred_check_branch
          %258 = sbr.rel (%p256) target = $region40
        $region39: #{tpu_custom_call.1} parent=31 // pred_region
          %s259 = sand.u32 %s22, 1
          %s260 = scalar_lea.sflag [#allocation6], %s259
          %s261 = sand.u32 %s58, 1
          %s262 = smul.addr %s261, 16
          %s263 = scalar_lea.vmem [#allocation5], %s262
          %s265 = ssub.s32 256, 256
          %266 = vsyncadd %s260, %s265
          %s267 = smul.addr %s22, 2
          %s268 = smul.addr %s267, 128
          %s269 = scalar_lea.hbm %s1, %s268
          %s270 = sshll.u32 %s263, 4
          %s271 = int_to_ptr.vmem [resolvable:$true] %s270
          %276 = dma.hbm_to_vmem [thread:$0]  %s269, 256, %s271, %s260, 128, 128, 8
        $region40: #{tpu_custom_call.1} parent=31 // pred_fallthru
          _
      $region32: #{tpu_custom_call.1} parent=5 // pred_fallthru
        _
      %p277 = scmp.le.s32.totalorder 1, %s22
      %p278 = scmp.lt.s32.totalorder %s22, 3
      %p279 = pnand %p277, %p278
      %p280 = pneg %p279
      // Predicated region
      $region41: #{tpu_custom_call.1} parent=5 // pred_check
        _
      $region42: #{tpu_custom_call.1} parent=5 // pred_check_branch
        %282 = sbr.rel (%p279) target = $region44
      $region43: #{tpu_custom_call.1} parent=5 // pred_region
        %s283 = ssub.s32 %s22, 1
        %s284 = sand.u32 %s35, 1
        %s285 = scalar_lea.sflag [#allocation3], %s284
        %s286 = sand.u32 %s35, 1
        %s287 = smul.addr %s286, 16
        %s288 = scalar_lea.vmem [#allocation2], %s287
        // Predicated region
        $region45: #{tpu_custom_call.1} parent=43 // pred_check
          %p289 = pneg %p48
        $region46: #{tpu_custom_call.1} parent=43 // pred_check_branch
          %291 = sbr.rel (%p289) target = $region48
        $region47: #{tpu_custom_call.1} parent=43 // pred_region
          %292 = dma.done %s285, 256
        $region48: #{tpu_custom_call.1} parent=43 // pred_fallthru
          _
        %s293 = sand.u32 %s27, 1
        %s294 = scalar_lea.sflag [#allocation6], %s293
        %s295 = sand.u32 %s61, 1
        %s296 = smul.addr %s295, 16
        %s297 = scalar_lea.vmem [#allocation5], %s296
        // Predicated region
        $region49: #{tpu_custom_call.1} parent=43 // pred_check
          %p298 = pneg %p74
        $region50: #{tpu_custom_call.1} parent=43 // pred_check_branch
          %300 = sbr.rel (%p298) target = $region52
        $region51: #{tpu_custom_call.1} parent=43 // pred_region
          %301 = dma.done %s294, 256
        $region52: #{tpu_custom_call.1} parent=43 // pred_fallthru
          _
        // Predicated region
        $region53: #{tpu_custom_call.1} parent=43 // pred_check
          %p302 = pneg %p95
        $region54: #{tpu_custom_call.1} parent=43 // pred_check_branch
          %304 = sbr.rel (%p302) target = $region56
        $region55: #{tpu_custom_call.1} parent=43 // pred_region
          %305 = dma.done [#allocation6], 512
        $region56: #{tpu_custom_call.1} parent=43 // pred_fallthru
          _
        // Predicated region
        $region57: #{tpu_custom_call.1} parent=43 // pred_check
          %p306 = pneg %p137
        $region58: #{tpu_custom_call.1} parent=43 // pred_check_branch
          %308 = sbr.rel (%p306) target = $region60
        $region59: #{tpu_custom_call.1} parent=43 // pred_region
          %309 = dma.done [#allocation9], 512
        $region60: #{tpu_custom_call.1} parent=43 // pred_fallthru
          _
        %s310 = sand.u32 %s35, 1
        %s311 = scalar_lea.sflag [#allocation3], %s310
        %s312 = sand.u32 %s35, 1
        %s313 = smul.addr %s312, 16
        %s314 = scalar_lea.vmem [#allocation2], %s313
        %p315 = pneg %p48
        %p316 = pneg %p45
        %s317 = sand.u32 %s27, 1
        %s318 = scalar_lea.sflag [#allocation6], %s317
        %s319 = sand.u32 %s61, 1
        %s320 = smul.addr %s319, 16
        %s321 = scalar_lea.vmem [#allocation5], %s320
        %p322 = pneg %p74
        %p323 = pneg %p71
        %p324 = pneg %p95
        %p325 = pneg %p92
        %p326 = pneg %p116
        %p327 = pneg %p113
        %p328 = pneg %p137
        %p329 = pneg %p134
        %p330 = pneg %p158
        %p331 = pneg %p155
        %p332 = pneg %p184
        %p333 = pneg %p181
        %s334 = sand.u32 %s171, 1
        %s335 = scalar_lea.sflag [#allocation4], %s334
        %s336 = sand.u32 %s171, 1
        %s337 = smul.addr %s336, 16
        %s338 = scalar_lea.vmem [#allocation10], %s337
        %v339 = vld [vmem:[%s288] sm:$0xff]
        %v340 = vld [vmem:[%s288 + $0x8] sm:$0xff]
        %v341 = vld [vmem:[%s297] sm:$0xff]
        %v342 = vld [vmem:[%s297 + $0x8] sm:$0xff]
        %v343 = vld [vmem:[#allocation7] sm:$0xff]
        %v344 = vld [vmem:[#allocation7 + $0x8] sm:$0xff]
        %v345 = vld [vmem:[#allocation7 + $0x10] sm:$0xff]
        %v346 = vld [vmem:[#allocation7 + $0x18] sm:$0xff]
        %v347 = vld [vmem:[%s3] sm:$0x1]
        %v349 = vlaneseq
        %v350 = vshrl.u32 %v349, 7
        %v351 = vsub.s32 0, %v350
        %v352 = vrot.slane %v347, %v351
        %vm354 = vcmask 261120
        %v356 = vsel %vm354, %v339, 0
        %v359 = vsel %vm354, %v340, 0
        %361 = vmatprep.subr.mxu0 0.0
        %362 = vmatpush1.msra.mxu0 %v343
        %363 = vmatprep.subr.mxu0 0.0
        %364 = vmatpush1.msra.mxu0 %v344
        %365 = vmatprep.subr.mxu0 0.0
        %366 = vmatpush1.msra.mxu0 %v345
        %367 = vmatprep.subr.mxu0 0.0
        %368 = vmatpush1.msra.mxu0 %v346
        %369 = vmatprep.subr.mxu0 0.0
        %370 = vmatpush1.msra.mxu0 0.0
        %371 = vmatprep.subr.mxu0 0.0
        %372 = vmatpush1.msra.mxu0 0.0
        %373 = vmatprep.subr.mxu0 0.0
        %374 = vmatpush1.msra.mxu0 0.0
        %375 = vmatprep.subr.mxu0 0.0
        %376 = vmatpush1.msra.mxu0 0.0
        %377 = vmatprep.subr.mxu0 0.0
        %378 = vmatpush1.msra.mxu0 0.0
        %379 = vmatprep.subr.mxu0 0.0
        %380 = vmatpush1.msra.mxu0 0.0
        %381 = vmatprep.subr.mxu0 0.0
        %382 = vmatpush1.msra.mxu0 0.0
        %383 = vmatprep.subr.mxu0 0.0
        %384 = vmatpush1.msra.mxu0 0.0
        %385 = vmatprep.subr.mxu0 0.0
        %386 = vmatpush1.msra.mxu0 0.0
        %387 = vmatprep.subr.mxu0 0.0
        %388 = vmatpush1.msra.mxu0 0.0
        %389 = vmatprep.subr.mxu0 0.0
        %390 = vmatpush1.msra.mxu0 0.0
        %391 = vmatprep.subr.mxu0 0.0
        %392 = vmatpush1.msra.mxu0 0.0
        %393 = vmatprep.subr.mxu0 0.0
        %394 = vmatpush1.msra.mxu0 0.0
        %395 = vmatprep.subr.mxu0 0.0
        %396 = vmatpush1.msra.mxu0 0.0
        %397 = vmatprep.subr.mxu0 0.0
        %398 = vmatpush1.msra.mxu0 0.0
        %399 = vmatprep.subr.mxu0 0.0
        %400 = vmatpush1.msra.mxu0 0.0
        %401 = vmatprep.subr.mxu0 0.0
        %402 = vmatpush1.msra.mxu0 0.0
        %403 = vmatprep.subr.mxu0 0.0
        %404 = vmatpush1.msra.mxu0 0.0
        %405 = vmatprep.subr.mxu0 0.0
        %406 = vmatpush1.msra.mxu0 0.0
        %407 = vmatprep.subr.mxu0 0.0
        %408 = vmatpush1.msra.mxu0 0.0
        %409 = vmatprep.subr.mxu0 0.0
        %410 = vmatpush1.msra.mxu0 0.0
        %411 = vmatprep.subr.mxu0 0.0
        %412 = vmatpush1.msra.mxu0 0.0
        %413 = vmatprep.subr.mxu0 0.0
        %414 = vmatpush1.msra.mxu0 0.0
        %415 = vmatprep.subr.mxu0 0.0
        %416 = vmatpush1.msra.mxu0 0.0
        %417 = vmatprep.subr.mxu0 0.0
        %418 = vmatpush1.msra.mxu0 0.0
        %419 = vmatprep.subr.mxu0 0.0
        %420 = vmatpush1.msra.mxu0 0.0
        %421 = vmatprep.subr.mxu0 0.0
        %422 = vmatpush1.msra.mxu0 0.0
        %423 = vmatprep.subr.mxu0 0.0
        %424 = vmatpush1.msra.mxu0 0.0
        %425 = vmatprep.mubr.f32.mxu0 0.0
        %426 = vmatmul.mubr.f32.gmra.mrb[0].mxu0 %v356
        %v427 = vpop.f32.mrb[0].mxu0
        %v428 = vadd.f32 %v352, %v427
        %v429 = vpop.f32.mrb[0].mxu0
        %430 = vmatprep.mubr.f32.mxu0 0.0
        %431 = vmatmul.mubr.f32.gmra.mrb[0].mxu0 %v359
        %v432 = vpop.f32.mrb[0].mxu0
        %v433 = vadd.f32 %v352, %v432
        %v434 = vpop.f32.mrb[0].mxu0
        %435 = vdwg.mxu0
        %v436 = vmul.f32 %v428, 0.5
        %v437 = vmul.f32 %v433, 0.5
        %v438 = vmul.f32 %v428, 0.70710677
        %v439 = vmul.f32 %v433, 0.70710677
        %v440 = verf.f32.pop %v438
        %v441 = verf.f32.pop %v439
        %v442 = vadd.f32 %v440, 1.0
        %v443 = vadd.f32 %v441, 1.0
        %v444 = vmul.f32 %v436, %v442
        %v445 = vmul.f32 %v437, %v443
        %v446 = vmul.f32 %v444, 0.17677669
        %v447 = vmul.f32 %v445, 0.17677669
        %v448 = vld [vmem:[#allocation8] sm:$0xff]
        %v449 = vld [vmem:[#allocation8 + $0x8] sm:$0xff]
        %v450 = vld [vmem:[#allocation8 + $0x10] sm:$0xff]
        %v451 = vld [vmem:[#allocation8 + $0x18] sm:$0xff]
        %v452 = vld [vmem:[%s5] sm:$0x1]
        %v454 = vlaneseq
        %v455 = vshrl.u32 %v454, 7
        %v456 = vsub.s32 0, %v455
        %v457 = vrot.slane %v452, %v456
        %v460 = vsel %vm354, %v341, 0
        %v463 = vsel %vm354, %v342, 0
        %465 = vmatprep.subr.mxu0 0.0
        %466 = vmatpush1.msra.mxu0 %v448
        %467 = vmatprep.subr.mxu0 0.0
        %468 = vmatpush1.msra.mxu0 %v449
        %469 = vmatprep.subr.mxu0 0.0
        %470 = vmatpush1.msra.mxu0 %v450
        %471 = vmatprep.subr.mxu0 0.0
        %472 = vmatpush1.msra.mxu0 %v451
        %473 = vmatprep.subr.mxu0 0.0
        %474 = vmatpush1.msra.mxu0 0.0
        %475 = vmatprep.subr.mxu0 0.0
        %476 = vmatpush1.msra.mxu0 0.0
        %477 = vmatprep.subr.mxu0 0.0
        %478 = vmatpush1.msra.mxu0 0.0
        %479 = vmatprep.subr.mxu0 0.0
        %480 = vmatpush1.msra.mxu0 0.0
        %481 = vmatprep.subr.mxu0 0.0
        %482 = vmatpush1.msra.mxu0 0.0
        %483 = vmatprep.subr.mxu0 0.0
        %484 = vmatpush1.msra.mxu0 0.0
        %485 = vmatprep.subr.mxu0 0.0
        %486 = vmatpush1.msra.mxu0 0.0
        %487 = vmatprep.subr.mxu0 0.0
        %488 = vmatpush1.msra.mxu0 0.0
        %489 = vmatprep.subr.mxu0 0.0
        %490 = vmatpush1.msra.mxu0 0.0
        %491 = vmatprep.subr.mxu0 0.0
        %492 = vmatpush1.msra.mxu0 0.0
        %493 = vmatprep.subr.mxu0 0.0
        %494 = vmatpush1.msra.mxu0 0.0
        %495 = vmatprep.subr.mxu0 0.0
        %496 = vmatpush1.msra.mxu0 0.0
        %497 = vmatprep.subr.mxu0 0.0
        %498 = vmatpush1.msra.mxu0 0.0
        %499 = vmatprep.subr.mxu0 0.0
        %500 = vmatpush1.msra.mxu0 0.0
        %501 = vmatprep.subr.mxu0 0.0
        %502 = vmatpush1.msra.mxu0 0.0
        %503 = vmatprep.subr.mxu0 0.0
        %504 = vmatpush1.msra.mxu0 0.0
        %505 = vmatprep.subr.mxu0 0.0
        %506 = vmatpush1.msra.mxu0 0.0
        %507 = vmatprep.subr.mxu0 0.0
        %508 = vmatpush1.msra.mxu0 0.0
        %509 = vmatprep.subr.mxu0 0.0
        %510 = vmatpush1.msra.mxu0 0.0
        %511 = vmatprep.subr.mxu0 0.0
        %512 = vmatpush1.msra.mxu0 0.0
        %513 = vmatprep.subr.mxu0 0.0
        %514 = vmatpush1.msra.mxu0 0.0
        %515 = vmatprep.subr.mxu0 0.0
        %516 = vmatpush1.msra.mxu0 0.0
        %517 = vmatprep.subr.mxu0 0.0
        %518 = vmatpush1.msra.mxu0 0.0
        %519 = vmatprep.subr.mxu0 0.0
        %520 = vmatpush1.msra.mxu0 0.0
        %521 = vmatprep.subr.mxu0 0.0
        %522 = vmatpush1.msra.mxu0 0.0
        %523 = vmatprep.subr.mxu0 0.0
        %524 = vmatpush1.msra.mxu0 0.0
        %525 = vmatprep.subr.mxu0 0.0
        %526 = vmatpush1.msra.mxu0 0.0
        %527 = vmatprep.subr.mxu0 0.0
        %528 = vmatpush1.msra.mxu0 0.0
        %529 = vmatprep.mubr.f32.mxu0 0.0
        %530 = vmatmul.mubr.f32.gmra.mrb[0].mxu0 %v460
        %v531 = vpop.f32.mrb[0].mxu0
        %v532 = vadd.f32 %v457, %v531
        %v533 = vpop.f32.mrb[0].mxu0
        %534 = vmatprep.mubr.f32.mxu0 0.0
        %535 = vmatmul.mubr.f32.gmra.mrb[0].mxu0 %v463
        %v536 = vpop.f32.mrb[0].mxu0
        %v537 = vadd.f32 %v457, %v536
        %v538 = vpop.f32.mrb[0].mxu0
        %539 = vdwg.mxu0
        %v540 = vmul.f32 %v532, 0.5
        %v541 = vmul.f32 %v537, 0.5
        %v542 = vmul.f32 %v532, 0.70710677
        %v543 = vmul.f32 %v537, 0.70710677
        %v544 = verf.f32.pop %v542
        %v545 = verf.f32.pop %v543
        %v546 = vadd.f32 %v544, 1.0
        %v547 = vadd.f32 %v545, 1.0
        %v548 = vmul.f32 %v540, %v546
        %v549 = vmul.f32 %v541, %v547
        %552 = vrot.lane.b32.xlu0 %v446, 120
        %v553 = vpop.permute.xlu0 %552
        %554 = vrot.lane.b32.xlu0 %v447, 120
        %v555 = vpop.permute.xlu0 %554
        %556 = vrot.lane.b32.xlu0 %v446, 112
        %v557 = vpop.permute.xlu0 %556
        %558 = vrot.lane.b32.xlu0 %v447, 112
        %v559 = vpop.permute.xlu0 %558
        %560 = vrot.lane.b32.xlu0 %v446, 104
        %v561 = vpop.permute.xlu0 %560
        %562 = vrot.lane.b32.xlu0 %v447, 104
        %v563 = vpop.permute.xlu0 %562
        %566 = vrot.lane.b32.xlu0 %v548, 120
        %v567 = vpop.permute.xlu0 %566
        %568 = vrot.lane.b32.xlu0 %v549, 120
        %v569 = vpop.permute.xlu0 %568
        %570 = vrot.lane.b32.xlu0 %v548, 112
        %v571 = vpop.permute.xlu0 %570
        %572 = vrot.lane.b32.xlu0 %v549, 112
        %v573 = vpop.permute.xlu0 %572
        %574 = vrot.lane.b32.xlu0 %v548, 104
        %v575 = vpop.permute.xlu0 %574
        %576 = vrot.lane.b32.xlu0 %v549, 104
        %v577 = vpop.permute.xlu0 %576
        %vm578 = vcmask 64512
        %v579 = vsel %vm578, %v446, 0
        %v581 = vsel %vm578, %v447, 0
        %v583 = vsel %vm578, %v548, 0
        %v585 = vsel %vm578, %v549, 0
        %587 = vmatprep.subr.mxu0 0.0
        %588 = vmatpush1.xpose.msra.mxu0 %v583
        %589 = vmatprep.subr.mxu0 0.0
        %590 = vmatpush1.xpose.msra.mxu0 %v585
        %591 = vmatprep.subr.mxu0 0.0
        %592 = vmatpush1.xpose.msra.mxu0 0.0
        %593 = vmatprep.subr.mxu0 0.0
        %594 = vmatpush1.xpose.msra.mxu0 0.0
        %595 = vmatprep.subr.mxu0 0.0
        %596 = vmatpush1.xpose.msra.mxu0 0.0
        %597 = vmatprep.subr.mxu0 0.0
        %598 = vmatpush1.xpose.msra.mxu0 0.0
        %599 = vmatprep.subr.mxu0 0.0
        %600 = vmatpush1.xpose.msra.mxu0 0.0
        %601 = vmatprep.subr.mxu0 0.0
        %602 = vmatpush1.xpose.msra.mxu0 0.0
        %603 = vmatprep.subr.mxu0 0.0
        %604 = vmatpush1.xpose.msra.mxu0 0.0
        %605 = vmatprep.subr.mxu0 0.0
        %606 = vmatpush1.xpose.msra.mxu0 0.0
        %607 = vmatprep.subr.mxu0 0.0
        %608 = vmatpush1.xpose.msra.mxu0 0.0
        %609 = vmatprep.subr.mxu0 0.0
        %610 = vmatpush1.xpose.msra.mxu0 0.0
        %611 = vmatprep.subr.mxu0 0.0
        %612 = vmatpush1.xpose.msra.mxu0 0.0
        %613 = vmatprep.subr.mxu0 0.0
        %614 = vmatpush1.xpose.msra.mxu0 0.0
        %615 = vmatprep.subr.mxu0 0.0
        %616 = vmatpush1.xpose.msra.mxu0 0.0
        %617 = vmatprep.subr.mxu0 0.0
        %618 = vmatpush1.xpose.msra.mxu0 0.0
        %619 = vmatprep.subr.mxu0 0.0
        %620 = vmatpush1.xpose.msra.mxu0 0.0
        %621 = vmatprep.subr.mxu0 0.0
        %622 = vmatpush1.xpose.msra.mxu0 0.0
        %623 = vmatprep.subr.mxu0 0.0
        %624 = vmatpush1.xpose.msra.mxu0 0.0
        %625 = vmatprep.subr.mxu0 0.0
        %626 = vmatpush1.xpose.msra.mxu0 0.0
        %627 = vmatprep.subr.mxu0 0.0
        %628 = vmatpush1.xpose.msra.mxu0 0.0
        %629 = vmatprep.subr.mxu0 0.0
        %630 = vmatpush1.xpose.msra.mxu0 0.0
        %631 = vmatprep.subr.mxu0 0.0
        %632 = vmatpush1.xpose.msra.mxu0 0.0
        %633 = vmatprep.subr.mxu0 0.0
        %634 = vmatpush1.xpose.msra.mxu0 0.0
        %635 = vmatprep.subr.mxu0 0.0
        %636 = vmatpush1.xpose.msra.mxu0 0.0
        %637 = vmatprep.subr.mxu0 0.0
        %638 = vmatpush1.xpose.msra.mxu0 0.0
        %639 = vmatprep.subr.mxu0 0.0
        %640 = vmatpush1.xpose.msra.mxu0 0.0
        %641 = vmatprep.subr.mxu0 0.0
        %642 = vmatpush1.xpose.msra.mxu0 0.0
        %643 = vmatprep.subr.mxu0 0.0
        %644 = vmatpush1.xpose.msra.mxu0 0.0
        %645 = vmatprep.subr.mxu0 0.0
        %646 = vmatpush1.xpose.msra.mxu0 0.0
        %647 = vmatprep.subr.mxu0 0.0
        %648 = vmatpush1.xpose.msra.mxu0 0.0
        %649 = vmatprep.subr.mxu0 0.0
        %650 = vmatpush1.xpose.msra.mxu0 0.0
        %651 = vmatprep.mubr.f32.mxu0 0.0
        %652 = vmatmul.mubr.f32.gmra.mrb[0].mxu0 %v579
        %v653 = vpop.f32.mrb[0].mxu0
        %v654 = vadd.f32 0.0, %v653
        %v655 = vpop.f32.mrb[0].mxu0
        %656 = vmatprep.mubr.f32.mxu0 0.0
        %657 = vmatmul.mubr.f32.gmra.mrb[0].mxu0 %v581
        %v658 = vpop.f32.mrb[0].mxu0
        %v659 = vadd.f32 0.0, %v658
        %v660 = vpop.f32.mrb[0].mxu0
        %661 = vdwg.mxu0
        %v662 = vsel %vm578, %v553, 0
        %v664 = vsel %vm578, %v555, 0
        %v666 = vsel %vm578, %v567, 0
        %v668 = vsel %vm578, %v569, 0
        %670 = vmatprep.subr.mxu0 0.0
        %671 = vmatpush1.xpose.msra.mxu0 %v666
        %672 = vmatprep.subr.mxu0 0.0
        %673 = vmatpush1.xpose.msra.mxu0 %v668
        %674 = vmatprep.subr.mxu0 0.0
        %675 = vmatpush1.xpose.msra.mxu0 0.0
        %676 = vmatprep.subr.mxu0 0.0
        %677 = vmatpush1.xpose.msra.mxu0 0.0
        %678 = vmatprep.subr.mxu0 0.0
        %679 = vmatpush1.xpose.msra.mxu0 0.0
        %680 = vmatprep.subr.mxu0 0.0
        %681 = vmatpush1.xpose.msra.mxu0 0.0
        %682 = vmatprep.subr.mxu0 0.0
        %683 = vmatpush1.xpose.msra.mxu0 0.0
        %684 = vmatprep.subr.mxu0 0.0
        %685 = vmatpush1.xpose.msra.mxu0 0.0
        %686 = vmatprep.subr.mxu0 0.0
        %687 = vmatpush1.xpose.msra.mxu0 0.0
        %688 = vmatprep.subr.mxu0 0.0
        %689 = vmatpush1.xpose.msra.mxu0 0.0
        %690 = vmatprep.subr.mxu0 0.0
        %691 = vmatpush1.xpose.msra.mxu0 0.0
        %692 = vmatprep.subr.mxu0 0.0
        %693 = vmatpush1.xpose.msra.mxu0 0.0
        %694 = vmatprep.subr.mxu0 0.0
        %695 = vmatpush1.xpose.msra.mxu0 0.0
        %696 = vmatprep.subr.mxu0 0.0
        %697 = vmatpush1.xpose.msra.mxu0 0.0
        %698 = vmatprep.subr.mxu0 0.0
        %699 = vmatpush1.xpose.msra.mxu0 0.0
        %700 = vmatprep.subr.mxu0 0.0
        %701 = vmatpush1.xpose.msra.mxu0 0.0
        %702 = vmatprep.subr.mxu0 0.0
        %703 = vmatpush1.xpose.msra.mxu0 0.0
        %704 = vmatprep.subr.mxu0 0.0
        %705 = vmatpush1.xpose.msra.mxu0 0.0
        %706 = vmatprep.subr.mxu0 0.0
        %707 = vmatpush1.xpose.msra.mxu0 0.0
        %708 = vmatprep.subr.mxu0 0.0
        %709 = vmatpush1.xpose.msra.mxu0 0.0
        %710 = vmatprep.subr.mxu0 0.0
        %711 = vmatpush1.xpose.msra.mxu0 0.0
        %712 = vmatprep.subr.mxu0 0.0
        %713 = vmatpush1.xpose.msra.mxu0 0.0
        %714 = vmatprep.subr.mxu0 0.0
        %715 = vmatpush1.xpose.msra.mxu0 0.0
        %716 = vmatprep.subr.mxu0 0.0
        %717 = vmatpush1.xpose.msra.mxu0 0.0
        %718 = vmatprep.subr.mxu0 0.0
        %719 = vmatpush1.xpose.msra.mxu0 0.0
        %720 = vmatprep.subr.mxu0 0.0
        %721 = vmatpush1.xpose.msra.mxu0 0.0
        %722 = vmatprep.subr.mxu0 0.0
        %723 = vmatpush1.xpose.msra.mxu0 0.0
        %724 = vmatprep.subr.mxu0 0.0
        %725 = vmatpush1.xpose.msra.mxu0 0.0
        %726 = vmatprep.subr.mxu0 0.0
        %727 = vmatpush1.xpose.msra.mxu0 0.0
        %728 = vmatprep.subr.mxu0 0.0
        %729 = vmatpush1.xpose.msra.mxu0 0.0
        %730 = vmatprep.subr.mxu0 0.0
        %731 = vmatpush1.xpose.msra.mxu0 0.0
        %732 = vmatprep.subr.mxu0 0.0
        %733 = vmatpush1.xpose.msra.mxu0 0.0
        %734 = vmatprep.mubr.f32.mxu0 0.0
        %735 = vmatmul.mubr.f32.gmra.mrb[0].mxu0 %v662
        %v736 = vpop.f32.mrb[0].mxu0
        %v737 = vadd.f32 0.0, %v736
        %v738 = vpop.f32.mrb[0].mxu0
        %739 = vmatprep.mubr.f32.mxu0 0.0
        %740 = vmatmul.mubr.f32.gmra.mrb[0].mxu0 %v664
        %v741 = vpop.f32.mrb[0].mxu0
        %v742 = vadd.f32 0.0, %v741
        %v743 = vpop.f32.mrb[0].mxu0
        %744 = vdwg.mxu0
        %v745 = vsel %vm578, %v557, 0
        %v747 = vsel %vm578, %v559, 0
        %v749 = vsel %vm578, %v571, 0
        %v751 = vsel %vm578, %v573, 0
        %753 = vmatprep.subr.mxu0 0.0
        %754 = vmatpush1.xpose.msra.mxu0 %v749
        %755 = vmatprep.subr.mxu0 0.0
        %756 = vmatpush1.xpose.msra.mxu0 %v751
        %757 = vmatprep.subr.mxu0 0.0
        %758 = vmatpush1.xpose.msra.mxu0 0.0
        %759 = vmatprep.subr.mxu0 0.0
        %760 = vmatpush1.xpose.msra.mxu0 0.0
        %761 = vmatprep.subr.mxu0 0.0
        %762 = vmatpush1.xpose.msra.mxu0 0.0
        %763 = vmatprep.subr.mxu0 0.0
        %764 = vmatpush1.xpose.msra.mxu0 0.0
        %765 = vmatprep.subr.mxu0 0.0
        %766 = vmatpush1.xpose.msra.mxu0 0.0
        %767 = vmatprep.subr.mxu0 0.0
        %768 = vmatpush1.xpose.msra.mxu0 0.0
        %769 = vmatprep.subr.mxu0 0.0
        %770 = vmatpush1.xpose.msra.mxu0 0.0
        %771 = vmatprep.subr.mxu0 0.0
        %772 = vmatpush1.xpose.msra.mxu0 0.0
        %773 = vmatprep.subr.mxu0 0.0
        %774 = vmatpush1.xpose.msra.mxu0 0.0
        %775 = vmatprep.subr.mxu0 0.0
        %776 = vmatpush1.xpose.msra.mxu0 0.0
        %777 = vmatprep.subr.mxu0 0.0
        %778 = vmatpush1.xpose.msra.mxu0 0.0
        %779 = vmatprep.subr.mxu0 0.0
        %780 = vmatpush1.xpose.msra.mxu0 0.0
        %781 = vmatprep.subr.mxu0 0.0
        %782 = vmatpush1.xpose.msra.mxu0 0.0
        %783 = vmatprep.subr.mxu0 0.0
        %784 = vmatpush1.xpose.msra.mxu0 0.0
        %785 = vmatprep.subr.mxu0 0.0
        %786 = vmatpush1.xpose.msra.mxu0 0.0
        %787 = vmatprep.subr.mxu0 0.0
        %788 = vmatpush1.xpose.msra.mxu0 0.0
        %789 = vmatprep.subr.mxu0 0.0
        %790 = vmatpush1.xpose.msra.mxu0 0.0
        %791 = vmatprep.subr.mxu0 0.0
        %792 = vmatpush1.xpose.msra.mxu0 0.0
        %793 = vmatprep.subr.mxu0 0.0
        %794 = vmatpush1.xpose.msra.mxu0 0.0
        %795 = vmatprep.subr.mxu0 0.0
        %796 = vmatpush1.xpose.msra.mxu0 0.0
        %797 = vmatprep.subr.mxu0 0.0
        %798 = vmatpush1.xpose.msra.mxu0 0.0
        %799 = vmatprep.subr.mxu0 0.0
        %800 = vmatpush1.xpose.msra.mxu0 0.0
        %801 = vmatprep.subr.mxu0 0.0
        %802 = vmatpush1.xpose.msra.mxu0 0.0
        %803 = vmatprep.subr.mxu0 0.0
        %804 = vmatpush1.xpose.msra.mxu0 0.0
        %805 = vmatprep.subr.mxu0 0.0
        %806 = vmatpush1.xpose.msra.mxu0 0.0
        %807 = vmatprep.subr.mxu0 0.0
        %808 = vmatpush1.xpose.msra.mxu0 0.0
        %809 = vmatprep.subr.mxu0 0.0
        %810 = vmatpush1.xpose.msra.mxu0 0.0
        %811 = vmatprep.subr.mxu0 0.0
        %812 = vmatpush1.xpose.msra.mxu0 0.0
        %813 = vmatprep.subr.mxu0 0.0
        %814 = vmatpush1.xpose.msra.mxu0 0.0
        %815 = vmatprep.subr.mxu0 0.0
        %816 = vmatpush1.xpose.msra.mxu0 0.0
        %817 = vmatprep.mubr.f32.mxu0 0.0
        %818 = vmatmul.mubr.f32.gmra.mrb[0].mxu0 %v745
        %v819 = vpop.f32.mrb[0].mxu0
        %v820 = vadd.f32 0.0, %v819
        %v821 = vpop.f32.mrb[0].mxu0
        %822 = vmatprep.mubr.f32.mxu0 0.0
        %823 = vmatmul.mubr.f32.gmra.mrb[0].mxu0 %v747
        %v824 = vpop.f32.mrb[0].mxu0
        %v825 = vadd.f32 0.0, %v824
        %v826 = vpop.f32.mrb[0].mxu0
        %827 = vdwg.mxu0
        %v828 = vsel %vm578, %v561, 0
        %v830 = vsel %vm578, %v563, 0
        %v832 = vsel %vm578, %v575, 0
        %v834 = vsel %vm578, %v577, 0
        %836 = vmatprep.subr.mxu0 0.0
        %837 = vmatpush1.xpose.msra.mxu0 %v832
        %838 = vmatprep.subr.mxu0 0.0
        %839 = vmatpush1.xpose.msra.mxu0 %v834
        %840 = vmatprep.subr.mxu0 0.0
        %841 = vmatpush1.xpose.msra.mxu0 0.0
        %842 = vmatprep.subr.mxu0 0.0
        %843 = vmatpush1.xpose.msra.mxu0 0.0
        %844 = vmatprep.subr.mxu0 0.0
        %845 = vmatpush1.xpose.msra.mxu0 0.0
        %846 = vmatprep.subr.mxu0 0.0
        %847 = vmatpush1.xpose.msra.mxu0 0.0
        %848 = vmatprep.subr.mxu0 0.0
        %849 = vmatpush1.xpose.msra.mxu0 0.0
        %850 = vmatprep.subr.mxu0 0.0
        %851 = vmatpush1.xpose.msra.mxu0 0.0
        %852 = vmatprep.subr.mxu0 0.0
        %853 = vmatpush1.xpose.msra.mxu0 0.0
        %854 = vmatprep.subr.mxu0 0.0
        %855 = vmatpush1.xpose.msra.mxu0 0.0
        %856 = vmatprep.subr.mxu0 0.0
        %857 = vmatpush1.xpose.msra.mxu0 0.0
        %858 = vmatprep.subr.mxu0 0.0
        %859 = vmatpush1.xpose.msra.mxu0 0.0
        %860 = vmatprep.subr.mxu0 0.0
        %861 = vmatpush1.xpose.msra.mxu0 0.0
        %862 = vmatprep.subr.mxu0 0.0
        %863 = vmatpush1.xpose.msra.mxu0 0.0
        %864 = vmatprep.subr.mxu0 0.0
        %865 = vmatpush1.xpose.msra.mxu0 0.0
        %866 = vmatprep.subr.mxu0 0.0
        %867 = vmatpush1.xpose.msra.mxu0 0.0
        %868 = vmatprep.subr.mxu0 0.0
        %869 = vmatpush1.xpose.msra.mxu0 0.0
        %870 = vmatprep.subr.mxu0 0.0
        %871 = vmatpush1.xpose.msra.mxu0 0.0
        %872 = vmatprep.subr.mxu0 0.0
        %873 = vmatpush1.xpose.msra.mxu0 0.0
        %874 = vmatprep.subr.mxu0 0.0
        %875 = vmatpush1.xpose.msra.mxu0 0.0
        %876 = vmatprep.subr.mxu0 0.0
        %877 = vmatpush1.xpose.msra.mxu0 0.0
        %878 = vmatprep.subr.mxu0 0.0
        %879 = vmatpush1.xpose.msra.mxu0 0.0
        %880 = vmatprep.subr.mxu0 0.0
        %881 = vmatpush1.xpose.msra.mxu0 0.0
        %882 = vmatprep.subr.mxu0 0.0
        %883 = vmatpush1.xpose.msra.mxu0 0.0
        %884 = vmatprep.subr.mxu0 0.0
        %885 = vmatpush1.xpose.msra.mxu0 0.0
        %886 = vmatprep.subr.mxu0 0.0
        %887 = vmatpush1.xpose.msra.mxu0 0.0
        %888 = vmatprep.subr.mxu0 0.0
        %889 = vmatpush1.xpose.msra.mxu0 0.0
        %890 = vmatprep.subr.mxu0 0.0
        %891 = vmatpush1.xpose.msra.mxu0 0.0
        %892 = vmatprep.subr.mxu0 0.0
        %893 = vmatpush1.xpose.msra.mxu0 0.0
        %894 = vmatprep.subr.mxu0 0.0
        %895 = vmatpush1.xpose.msra.mxu0 0.0
        %896 = vmatprep.subr.mxu0 0.0
        %897 = vmatpush1.xpose.msra.mxu0 0.0
        %898 = vmatprep.subr.mxu0 0.0
        %899 = vmatpush1.xpose.msra.mxu0 0.0
        %900 = vmatprep.mubr.f32.mxu0 0.0
        %901 = vmatmul.mubr.f32.gmra.mrb[0].mxu0 %v828
        %v902 = vpop.f32.mrb[0].mxu0
        %v903 = vadd.f32 0.0, %v902
        %v904 = vpop.f32.mrb[0].mxu0
        %905 = vmatprep.mubr.f32.mxu0 0.0
        %906 = vmatmul.mubr.f32.gmra.mrb[0].mxu0 %v830
        %v907 = vpop.f32.mrb[0].mxu0
        %v908 = vadd.f32 0.0, %v907
        %v909 = vpop.f32.mrb[0].mxu0
        %910 = vdwg.mxu0
        %vm911 = vcmask 130048
        %v912 = vsel %vm911, %v654, -inf
        %913 = vmax.xlane.f32.xlu0 %v912
        %v914 = vpop.xlane.xlu0 %913
        %v915 = vsel %vm911, %v659, -inf
        %916 = vmax.xlane.f32.xlu0 %v915
        %v917 = vpop.xlane.xlu0 %916
        %v918 = vsel %vm911, %v737, -inf
        %919 = vmax.xlane.f32.xlu0 %v918
        %v920 = vpop.xlane.xlu0 %919
        %v921 = vsel %vm911, %v742, -inf
        %922 = vmax.xlane.f32.xlu0 %v921
        %v923 = vpop.xlane.xlu0 %922
        %v924 = vsel %vm911, %v820, -inf
        %925 = vmax.xlane.f32.xlu0 %v924
        %v926 = vpop.xlane.xlu0 %925
        %v927 = vsel %vm911, %v825, -inf
        %928 = vmax.xlane.f32.xlu0 %v927
        %v929 = vpop.xlane.xlu0 %928
        %v930 = vsel %vm911, %v903, -inf
        %931 = vmax.xlane.f32.xlu0 %v930
        %v932 = vpop.xlane.xlu0 %931
        %v933 = vsel %vm911, %v908, -inf
        %934 = vmax.xlane.f32.xlu0 %v933
        %v935 = vpop.xlane.xlu0 %934
        %v936 = vsub.f32 %v654, %v914
        %v937 = vsub.f32 %v659, %v917
        %v938 = vsub.f32 %v737, %v920
        %v939 = vsub.f32 %v742, %v923
        %v940 = vsub.f32 %v820, %v926
        %v941 = vsub.f32 %v825, %v929
        %v942 = vsub.f32 %v903, %v932
        %v943 = vsub.f32 %v908, %v935
        %v944 = vmul.f32 %v936, 1.442695
        %v945 = vpow.pop %v944
        %v946 = vmul.f32 %v937, 1.442695
        %v947 = vpow.pop %v946
        %v948 = vmul.f32 %v938, 1.442695
        %v949 = vpow.pop %v948
        %v950 = vmul.f32 %v939, 1.442695
        %v951 = vpow.pop %v950
        %v952 = vmul.f32 %v940, 1.442695
        %v953 = vpow.pop %v952
        %v954 = vmul.f32 %v941, 1.442695
        %v955 = vpow.pop %v954
        %v956 = vmul.f32 %v942, 1.442695
        %v957 = vpow.pop %v956
        %v958 = vmul.f32 %v943, 1.442695
        %v959 = vpow.pop %v958
        %v960 = vsel %vm911, %v945, 0.0
        %961 = vadd.xlane.f32.xlu0 %v960
        %v962 = vpop.xlane.xlu0 %961
        %v963 = vsel %vm911, %v947, 0.0
        %964 = vadd.xlane.f32.xlu0 %v963
        %v965 = vpop.xlane.xlu0 %964
        %v966 = vsel %vm911, %v949, 0.0
        %967 = vadd.xlane.f32.xlu0 %v966
        %v968 = vpop.xlane.xlu0 %967
        %v969 = vsel %vm911, %v951, 0.0
        %970 = vadd.xlane.f32.xlu0 %v969
        %v971 = vpop.xlane.xlu0 %970
        %v972 = vsel %vm911, %v953, 0.0
        %973 = vadd.xlane.f32.xlu0 %v972
        %v974 = vpop.xlane.xlu0 %973
        %v975 = vsel %vm911, %v955, 0.0
        %976 = vadd.xlane.f32.xlu0 %v975
        %v977 = vpop.xlane.xlu0 %976
        %v978 = vsel %vm911, %v957, 0.0
        %979 = vadd.xlane.f32.xlu0 %v978
        %v980 = vpop.xlane.xlu0 %979
        %v981 = vsel %vm911, %v959, 0.0
        %982 = vadd.xlane.f32.xlu0 %v981
        %v983 = vpop.xlane.xlu0 %982
        %v984 = vrcp.pop %v962
        %v985 = vrcp.pop %v965
        %v986 = vrcp.pop %v968
        %v987 = vrcp.pop %v971
        %v988 = vrcp.pop %v974
        %v989 = vrcp.pop %v977
        %v990 = vrcp.pop %v980
        %v991 = vrcp.pop %v983
        %v992 = vmul.f32 %v945, %v984
        %v993 = vmul.f32 %v947, %v985
        %v994 = vmul.f32 %v949, %v986
        %v995 = vmul.f32 %v951, %v987
        %v996 = vmul.f32 %v953, %v988
        %v997 = vmul.f32 %v955, %v989
        %v998 = vmul.f32 %v957, %v990
        %v999 = vmul.f32 %v959, %v991
        %1000 = vrot.lane.b32.xlu0 %v548, 96
        %v1001 = vpop.permute.xlu0 %1000
        %1002 = vrot.lane.b32.xlu0 %v549, 96
        %v1003 = vpop.permute.xlu0 %1002
        %v1007 = vsel %vm911, %v992, 0
        %v1010 = vsel %vm911, %v993, 0
        %1012 = vmatprep.subr.mxu0 0.0
        %1013 = vmatpush1.msra.mxu0 %v1001
        %1014 = vmatprep.subr.mxu0 0.0
        %1015 = vmatpush1.msra.mxu0 %v1003
        %1016 = vmatprep.subr.mxu0 0.0
        %1017 = vmatpush1.msra.mxu0 0.0
        %1018 = vmatprep.subr.mxu0 0.0
        %1019 = vmatpush1.msra.mxu0 0.0
        %1020 = vmatprep.subr.mxu0 0.0
        %1021 = vmatpush1.msra.mxu0 0.0
        %1022 = vmatprep.subr.mxu0 0.0
        %1023 = vmatpush1.msra.mxu0 0.0
        %1024 = vmatprep.subr.mxu0 0.0
        %1025 = vmatpush1.msra.mxu0 0.0
        %1026 = vmatprep.subr.mxu0 0.0
        %1027 = vmatpush1.msra.mxu0 0.0
        %1028 = vmatprep.subr.mxu0 0.0
        %1029 = vmatpush1.msra.mxu0 0.0
        %1030 = vmatprep.subr.mxu0 0.0
        %1031 = vmatpush1.msra.mxu0 0.0
        %1032 = vmatprep.subr.mxu0 0.0
        %1033 = vmatpush1.msra.mxu0 0.0
        %1034 = vmatprep.subr.mxu0 0.0
        %1035 = vmatpush1.msra.mxu0 0.0
        %1036 = vmatprep.subr.mxu0 0.0
        %1037 = vmatpush1.msra.mxu0 0.0
        %1038 = vmatprep.subr.mxu0 0.0
        %1039 = vmatpush1.msra.mxu0 0.0
        %1040 = vmatprep.subr.mxu0 0.0
        %1041 = vmatpush1.msra.mxu0 0.0
        %1042 = vmatprep.subr.mxu0 0.0
        %1043 = vmatpush1.msra.mxu0 0.0
        %1044 = vmatprep.subr.mxu0 0.0
        %1045 = vmatpush1.msra.mxu0 0.0
        %1046 = vmatprep.subr.mxu0 0.0
        %1047 = vmatpush1.msra.mxu0 0.0
        %1048 = vmatprep.subr.mxu0 0.0
        %1049 = vmatpush1.msra.mxu0 0.0
        %1050 = vmatprep.subr.mxu0 0.0
        %1051 = vmatpush1.msra.mxu0 0.0
        %1052 = vmatprep.subr.mxu0 0.0
        %1053 = vmatpush1.msra.mxu0 0.0
        %1054 = vmatprep.subr.mxu0 0.0
        %1055 = vmatpush1.msra.mxu0 0.0
        %1056 = vmatprep.subr.mxu0 0.0
        %1057 = vmatpush1.msra.mxu0 0.0
        %1058 = vmatprep.subr.mxu0 0.0
        %1059 = vmatpush1.msra.mxu0 0.0
        %1060 = vmatprep.subr.mxu0 0.0
        %1061 = vmatpush1.msra.mxu0 0.0
        %1062 = vmatprep.subr.mxu0 0.0
        %1063 = vmatpush1.msra.mxu0 0.0
        %1064 = vmatprep.subr.mxu0 0.0
        %1065 = vmatpush1.msra.mxu0 0.0
        %1066 = vmatprep.subr.mxu0 0.0
        %1067 = vmatpush1.msra.mxu0 0.0
        %1068 = vmatprep.subr.mxu0 0.0
        %1069 = vmatpush1.msra.mxu0 0.0
        %1070 = vmatprep.subr.mxu0 0.0
        %1071 = vmatpush1.msra.mxu0 0.0
        %1072 = vmatprep.subr.mxu0 0.0
        %1073 = vmatpush1.msra.mxu0 0.0
        %1074 = vmatprep.subr.mxu0 0.0
        %1075 = vmatpush1.msra.mxu0 0.0
        %1076 = vmatprep.mubr.f32.mxu0 0.0
        %1077 = vmatmul.mubr.f32.gmra.mrb[0].mxu0 %v1007
        %v1078 = vpop.f32.mrb[0].mxu0
        %v1079 = vadd.f32 0.0, %v1078
        %v1080 = vpop.f32.mrb[0].mxu0
        %1081 = vmatprep.mubr.f32.mxu0 0.0
        %1082 = vmatmul.mubr.f32.gmra.mrb[0].mxu0 %v1010
        %v1083 = vpop.f32.mrb[0].mxu0
        %v1084 = vadd.f32 0.0, %v1083
        %v1085 = vpop.f32.mrb[0].mxu0
        %1086 = vdwg.mxu0
        %1087 = vrot.lane.b32.xlu0 %v567, 96
        %v1088 = vpop.permute.xlu0 %1087
        %1089 = vrot.lane.b32.xlu0 %v569, 96
        %v1090 = vpop.permute.xlu0 %1089
        %v1094 = vsel %vm911, %v994, 0
        %v1097 = vsel %vm911, %v995, 0
        %1099 = vmatprep.subr.mxu0 0.0
        %1100 = vmatpush1.msra.mxu0 %v1088
        %1101 = vmatprep.subr.mxu0 0.0
        %1102 = vmatpush1.msra.mxu0 %v1090
        %1103 = vmatprep.subr.mxu0 0.0
        %1104 = vmatpush1.msra.mxu0 0.0
        %1105 = vmatprep.subr.mxu0 0.0
        %1106 = vmatpush1.msra.mxu0 0.0
        %1107 = vmatprep.subr.mxu0 0.0
        %1108 = vmatpush1.msra.mxu0 0.0
        %1109 = vmatprep.subr.mxu0 0.0
        %1110 = vmatpush1.msra.mxu0 0.0
        %1111 = vmatprep.subr.mxu0 0.0
        %1112 = vmatpush1.msra.mxu0 0.0
        %1113 = vmatprep.subr.mxu0 0.0
        %1114 = vmatpush1.msra.mxu0 0.0
        %1115 = vmatprep.subr.mxu0 0.0
        %1116 = vmatpush1.msra.mxu0 0.0
        %1117 = vmatprep.subr.mxu0 0.0
        %1118 = vmatpush1.msra.mxu0 0.0
        %1119 = vmatprep.subr.mxu0 0.0
        %1120 = vmatpush1.msra.mxu0 0.0
        %1121 = vmatprep.subr.mxu0 0.0
        %1122 = vmatpush1.msra.mxu0 0.0
        %1123 = vmatprep.subr.mxu0 0.0
        %1124 = vmatpush1.msra.mxu0 0.0
        %1125 = vmatprep.subr.mxu0 0.0
        %1126 = vmatpush1.msra.mxu0 0.0
        %1127 = vmatprep.subr.mxu0 0.0
        %1128 = vmatpush1.msra.mxu0 0.0
        %1129 = vmatprep.subr.mxu0 0.0
        %1130 = vmatpush1.msra.mxu0 0.0
        %1131 = vmatprep.subr.mxu0 0.0
        %1132 = vmatpush1.msra.mxu0 0.0
        %1133 = vmatprep.subr.mxu0 0.0
        %1134 = vmatpush1.msra.mxu0 0.0
        %1135 = vmatprep.subr.mxu0 0.0
        %1136 = vmatpush1.msra.mxu0 0.0
        %1137 = vmatprep.subr.mxu0 0.0
        %1138 = vmatpush1.msra.mxu0 0.0
        %1139 = vmatprep.subr.mxu0 0.0
        %1140 = vmatpush1.msra.mxu0 0.0
        %1141 = vmatprep.subr.mxu0 0.0
        %1142 = vmatpush1.msra.mxu0 0.0
        %1143 = vmatprep.subr.mxu0 0.0
        %1144 = vmatpush1.msra.mxu0 0.0
        %1145 = vmatprep.subr.mxu0 0.0
        %1146 = vmatpush1.msra.mxu0 0.0
        %1147 = vmatprep.subr.mxu0 0.0
        %1148 = vmatpush1.msra.mxu0 0.0
        %1149 = vmatprep.subr.mxu0 0.0
        %1150 = vmatpush1.msra.mxu0 0.0
        %1151 = vmatprep.subr.mxu0 0.0
        %1152 = vmatpush1.msra.mxu0 0.0
        %1153 = vmatprep.subr.mxu0 0.0
        %1154 = vmatpush1.msra.mxu0 0.0
        %1155 = vmatprep.subr.mxu0 0.0
        %1156 = vmatpush1.msra.mxu0 0.0
        %1157 = vmatprep.subr.mxu0 0.0
        %1158 = vmatpush1.msra.mxu0 0.0
        %1159 = vmatprep.subr.mxu0 0.0
        %1160 = vmatpush1.msra.mxu0 0.0
        %1161 = vmatprep.subr.mxu0 0.0
        %1162 = vmatpush1.msra.mxu0 0.0
        %1163 = vmatprep.mubr.f32.mxu0 0.0
        %1164 = vmatmul.mubr.f32.gmra.mrb[0].mxu0 %v1094
        %v1165 = vpop.f32.mrb[0].mxu0
        %v1166 = vadd.f32 0.0, %v1165
        %v1167 = vpop.f32.mrb[0].mxu0
        %1168 = vmatprep.mubr.f32.mxu0 0.0
        %1169 = vmatmul.mubr.f32.gmra.mrb[0].mxu0 %v1097
        %v1170 = vpop.f32.mrb[0].mxu0
        %v1171 = vadd.f32 0.0, %v1170
        %v1172 = vpop.f32.mrb[0].mxu0
        %1173 = vdwg.mxu0
        %1174 = vrot.lane.b32.xlu0 %v571, 96
        %v1175 = vpop.permute.xlu0 %1174
        %1176 = vrot.lane.b32.xlu0 %v573, 96
        %v1177 = vpop.permute.xlu0 %1176
        %v1181 = vsel %vm911, %v996, 0
        %v1184 = vsel %vm911, %v997, 0
        %1186 = vmatprep.subr.mxu0 0.0
        %1187 = vmatpush1.msra.mxu0 %v1175
        %1188 = vmatprep.subr.mxu0 0.0
        %1189 = vmatpush1.msra.mxu0 %v1177
        %1190 = vmatprep.subr.mxu0 0.0
        %1191 = vmatpush1.msra.mxu0 0.0
        %1192 = vmatprep.subr.mxu0 0.0
        %1193 = vmatpush1.msra.mxu0 0.0
        %1194 = vmatprep.subr.mxu0 0.0
        %1195 = vmatpush1.msra.mxu0 0.0
        %1196 = vmatprep.subr.mxu0 0.0
        %1197 = vmatpush1.msra.mxu0 0.0
        %1198 = vmatprep.subr.mxu0 0.0
        %1199 = vmatpush1.msra.mxu0 0.0
        %1200 = vmatprep.subr.mxu0 0.0
        %1201 = vmatpush1.msra.mxu0 0.0
        %1202 = vmatprep.subr.mxu0 0.0
        %1203 = vmatpush1.msra.mxu0 0.0
        %1204 = vmatprep.subr.mxu0 0.0
        %1205 = vmatpush1.msra.mxu0 0.0
        %1206 = vmatprep.subr.mxu0 0.0
        %1207 = vmatpush1.msra.mxu0 0.0
        %1208 = vmatprep.subr.mxu0 0.0
        %1209 = vmatpush1.msra.mxu0 0.0
        %1210 = vmatprep.subr.mxu0 0.0
        %1211 = vmatpush1.msra.mxu0 0.0
        %1212 = vmatprep.subr.mxu0 0.0
        %1213 = vmatpush1.msra.mxu0 0.0
        %1214 = vmatprep.subr.mxu0 0.0
        %1215 = vmatpush1.msra.mxu0 0.0
        %1216 = vmatprep.subr.mxu0 0.0
        %1217 = vmatpush1.msra.mxu0 0.0
        %1218 = vmatprep.subr.mxu0 0.0
        %1219 = vmatpush1.msra.mxu0 0.0
        %1220 = vmatprep.subr.mxu0 0.0
        %1221 = vmatpush1.msra.mxu0 0.0
        %1222 = vmatprep.subr.mxu0 0.0
        %1223 = vmatpush1.msra.mxu0 0.0
        %1224 = vmatprep.subr.mxu0 0.0
        %1225 = vmatpush1.msra.mxu0 0.0
        %1226 = vmatprep.subr.mxu0 0.0
        %1227 = vmatpush1.msra.mxu0 0.0
        %1228 = vmatprep.subr.mxu0 0.0
        %1229 = vmatpush1.msra.mxu0 0.0
        %1230 = vmatprep.subr.mxu0 0.0
        %1231 = vmatpush1.msra.mxu0 0.0
        %1232 = vmatprep.subr.mxu0 0.0
        %1233 = vmatpush1.msra.mxu0 0.0
        %1234 = vmatprep.subr.mxu0 0.0
        %1235 = vmatpush1.msra.mxu0 0.0
        %1236 = vmatprep.subr.mxu0 0.0
        %1237 = vmatpush1.msra.mxu0 0.0
        %1238 = vmatprep.subr.mxu0 0.0
        %1239 = vmatpush1.msra.mxu0 0.0
        %1240 = vmatprep.subr.mxu0 0.0
        %1241 = vmatpush1.msra.mxu0 0.0
        %1242 = vmatprep.subr.mxu0 0.0
        %1243 = vmatpush1.msra.mxu0 0.0
        %1244 = vmatprep.subr.mxu0 0.0
        %1245 = vmatpush1.msra.mxu0 0.0
        %1246 = vmatprep.subr.mxu0 0.0
        %1247 = vmatpush1.msra.mxu0 0.0
        %1248 = vmatprep.subr.mxu0 0.0
        %1249 = vmatpush1.msra.mxu0 0.0
        %1250 = vmatprep.mubr.f32.mxu0 0.0
        %1251 = vmatmul.mubr.f32.gmra.mrb[0].mxu0 %v1181
        %v1252 = vpop.f32.mrb[0].mxu0
        %v1253 = vadd.f32 0.0, %v1252
        %v1254 = vpop.f32.mrb[0].mxu0
        %1255 = vmatprep.mubr.f32.mxu0 0.0
        %1256 = vmatmul.mubr.f32.gmra.mrb[0].mxu0 %v1184
        %v1257 = vpop.f32.mrb[0].mxu0
        %v1258 = vadd.f32 0.0, %v1257
        %v1259 = vpop.f32.mrb[0].mxu0
        %1260 = vdwg.mxu0
        %1261 = vrot.lane.b32.xlu0 %v575, 96
        %v1262 = vpop.permute.xlu0 %1261
        %1263 = vrot.lane.b32.xlu0 %v577, 96
        %v1264 = vpop.permute.xlu0 %1263
        %v1268 = vsel %vm911, %v998, 0
        %v1271 = vsel %vm911, %v999, 0
        %1273 = vmatprep.subr.mxu0 0.0
        %1274 = vmatpush1.msra.mxu0 %v1262
        %1275 = vmatprep.subr.mxu0 0.0
        %1276 = vmatpush1.msra.mxu0 %v1264
        %1277 = vmatprep.subr.mxu0 0.0
        %1278 = vmatpush1.msra.mxu0 0.0
        %1279 = vmatprep.subr.mxu0 0.0
        %1280 = vmatpush1.msra.mxu0 0.0
        %1281 = vmatprep.subr.mxu0 0.0
        %1282 = vmatpush1.msra.mxu0 0.0
        %1283 = vmatprep.subr.mxu0 0.0
        %1284 = vmatpush1.msra.mxu0 0.0
        %1285 = vmatprep.subr.mxu0 0.0
        %1286 = vmatpush1.msra.mxu0 0.0
        %1287 = vmatprep.subr.mxu0 0.0
        %1288 = vmatpush1.msra.mxu0 0.0
        %1289 = vmatprep.subr.mxu0 0.0
        %1290 = vmatpush1.msra.mxu0 0.0
        %1291 = vmatprep.subr.mxu0 0.0
        %1292 = vmatpush1.msra.mxu0 0.0
        %1293 = vmatprep.subr.mxu0 0.0
        %1294 = vmatpush1.msra.mxu0 0.0
        %1295 = vmatprep.subr.mxu0 0.0
        %1296 = vmatpush1.msra.mxu0 0.0
        %1297 = vmatprep.subr.mxu0 0.0
        %1298 = vmatpush1.msra.mxu0 0.0
        %1299 = vmatprep.subr.mxu0 0.0
        %1300 = vmatpush1.msra.mxu0 0.0
        %1301 = vmatprep.subr.mxu0 0.0
        %1302 = vmatpush1.msra.mxu0 0.0
        %1303 = vmatprep.subr.mxu0 0.0
        %1304 = vmatpush1.msra.mxu0 0.0
        %1305 = vmatprep.subr.mxu0 0.0
        %1306 = vmatpush1.msra.mxu0 0.0
        %1307 = vmatprep.subr.mxu0 0.0
        %1308 = vmatpush1.msra.mxu0 0.0
        %1309 = vmatprep.subr.mxu0 0.0
        %1310 = vmatpush1.msra.mxu0 0.0
        %1311 = vmatprep.subr.mxu0 0.0
        %1312 = vmatpush1.msra.mxu0 0.0
        %1313 = vmatprep.subr.mxu0 0.0
        %1314 = vmatpush1.msra.mxu0 0.0
        %1315 = vmatprep.subr.mxu0 0.0
        %1316 = vmatpush1.msra.mxu0 0.0
        %1317 = vmatprep.subr.mxu0 0.0
        %1318 = vmatpush1.msra.mxu0 0.0
        %1319 = vmatprep.subr.mxu0 0.0
        %1320 = vmatpush1.msra.mxu0 0.0
        %1321 = vmatprep.subr.mxu0 0.0
        %1322 = vmatpush1.msra.mxu0 0.0
        %1323 = vmatprep.subr.mxu0 0.0
        %1324 = vmatpush1.msra.mxu0 0.0
        %1325 = vmatprep.subr.mxu0 0.0
        %1326 = vmatpush1.msra.mxu0 0.0
        %1327 = vmatprep.subr.mxu0 0.0
        %1328 = vmatpush1.msra.mxu0 0.0
        %1329 = vmatprep.subr.mxu0 0.0
        %1330 = vmatpush1.msra.mxu0 0.0
        %1331 = vmatprep.subr.mxu0 0.0
        %1332 = vmatpush1.msra.mxu0 0.0
        %1333 = vmatprep.subr.mxu0 0.0
        %1334 = vmatpush1.msra.mxu0 0.0
        %1335 = vmatprep.subr.mxu0 0.0
        %1336 = vmatpush1.msra.mxu0 0.0
        %1337 = vmatprep.mubr.f32.mxu0 0.0
        %1338 = vmatmul.mubr.f32.gmra.mrb[0].mxu0 %v1268
        %v1339 = vpop.f32.mrb[0].mxu0
        %v1340 = vadd.f32 0.0, %v1339
        %v1341 = vpop.f32.mrb[0].mxu0
        %1342 = vmatprep.mubr.f32.mxu0 0.0
        %1343 = vmatmul.mubr.f32.gmra.mrb[0].mxu0 %v1271
        %v1344 = vpop.f32.mrb[0].mxu0
        %v1345 = vadd.f32 0.0, %v1344
        %v1346 = vpop.f32.mrb[0].mxu0
        %1347 = vdwg.mxu0
        %1350 = vrot.lane.b32.xlu0 %v1166, 8
        %v1351 = vpop.permute.xlu0 %1350
        %1352 = vrot.lane.b32.xlu0 %v1171, 8
        %v1353 = vpop.permute.xlu0 %1352
        %1358 = vrot.lane.b32.xlu0 %v1253, 16
        %v1359 = vpop.permute.xlu0 %1358
        %1360 = vrot.lane.b32.xlu0 %v1258, 16
        %v1361 = vpop.permute.xlu0 %1360
        %1366 = vrot.lane.b32.xlu0 %v1340, 24
        %v1367 = vpop.permute.xlu0 %1366
        %1368 = vrot.lane.b32.xlu0 %v1345, 24
        %v1369 = vpop.permute.xlu0 %1368
        %v1372 = vsel %vm578, %v1079, %v1351
        %v1373 = vsel %vm578, %v1084, %v1353
        %v1374 = vsel %vm911, %v1372, %v1359
        %v1375 = vsel %vm911, %v1373, %v1361
        %vm1376 = vcmask 195584
        %v1377 = vsel %vm1376, %v1374, %v1367
        %v1378 = vsel %vm1376, %v1375, %v1369
        %1379 = vst.msk [vmem:[%s338] sm:$0xff] %vm354, %v1377
        %1380 = vst.msk [vmem:[%s338 + $0x8] sm:$0xff] %vm354, %v1378
        %s1381 = sand.u32 %s171, 1
        %s1382 = scalar_lea.sflag [#allocation4], %s1381
        %s1383 = sand.u32 %s171, 1
        %s1384 = smul.addr %s1383, 16
        %s1385 = scalar_lea.vmem [#allocation10], %s1384
        // Predicated region
        $region61: #{tpu_custom_call.1} parent=43 // pred_check
          %p1386 = pneg %p181
        $region62: #{tpu_custom_call.1} parent=43 // pred_check_branch
          %1388 = sbr.rel (%p1386) target = $region64
        $region63: #{tpu_custom_call.1} parent=43 // pred_region
          %s1390 = ssub.s32 256, 256
          %1391 = vsyncadd %s1382, %s1390
          %s1392 = smul.addr %s27, 2
          %s1393 = smul.addr %s1392, 128
          %s1394 = scalar_lea.hbm %s6, %s1393
          %s1395 = sshll.u32 %s1385, 4
          %s1396 = int_to_ptr.vmem [resolvable:$true] %s1395
          %1401 = dma.vmem_to_hbm [thread:$0]  %s1396, 256, %s1394, %s1382, 128, 128, 8
        $region64: #{tpu_custom_call.1} parent=43 // pred_fallthru
          _
      $region44: #{tpu_custom_call.1} parent=5 // pred_fallthru
        _
      %p1402 = scmp.le.s32.totalorder 2, %s22
      // Predicated region
      $region65: #{tpu_custom_call.1} parent=5 // pred_check
        %p1403 = pneg %p1402
      $region66: #{tpu_custom_call.1} parent=5 // pred_check_branch
        %1405 = sbr.rel (%p1403) target = $region68
      $region67: #{tpu_custom_call.1} parent=5 // pred_region
        %s1406 = ssub.s32 %s22, 2
        // Predicated region
        $region69: #{tpu_custom_call.1} parent=67 // pred_check
          %p1407 = pneg %p187
        $region70: #{tpu_custom_call.1} parent=67 // pred_check_branch
          %1409 = sbr.rel (%p1407) target = $region72
        $region71: #{tpu_custom_call.1} parent=67 // pred_region
          %s1410 = sand.u32 %s172, 1
          %s1411 = scalar_lea.sflag [#allocation4], %s1410
          %s1412 = sand.u32 %s172, 1
          %s1413 = smul.addr %s1412, 16
          %s1414 = scalar_lea.vmem [#allocation10], %s1413
          %1415 = dma.done %s1411, 256
        $region72: #{tpu_custom_call.1} parent=67 // pred_fallthru
          _
      $region68: #{tpu_custom_call.1} parent=5 // pred_fallthru
        _
    $region6: #{tpu_custom_call.1} parent=1 // loop_footer
      %s26 = sadd.s32 1, %s22
    $region7: #{tpu_custom_call.1} parent=1 // loop_footer_branch
      %21 = sbr.rel target = $region3
    $region8: #{tpu_custom_call.1} parent=1 // loop_exit
      _
    %1416 = vsyncpa [#allocation3], 1
    %s1417 = scalar_lea.sflag [#allocation3], 1
    %1418 = vsyncpa %s1417, 1
    %1419 = vsyncpa [#allocation6], 1
    %s1420 = scalar_lea.sflag [#allocation6], 1
    %1421 = vsyncpa %s1420, 1
    %1422 = vsyncpa [#allocation9], 1
    %1423 = vsyncpa [#allocation4], 1
    %s1424 = scalar_lea.sflag [#allocation4], 1
    %1425 = vsyncpa %s1424, 1

</llo_original>
